<compile_context>
chip_gen: v7x
topology: tpu7x:2x2x1
jax: 0.10.0
libtpu: 0.0.40
codegen_flags: <defaults>
</compile_context>

<pallas_src>
import functools

import jax
import jax.numpy as jnp
from jax.experimental import pallas as pl
from jax.experimental.pallas import tpu as pltpu

F_PAD = 128        # pad all feature / hidden / class dims to one full lane width
N_QUANTUM = 128    # node-count padding quantum (independent of tile size)
NUM_LAYERS = 4


def _round_up(x, m):
    return ((x + m - 1) // m) * m


def _vmem_capacity_bytes():
    try:
        info = pltpu.get_tpu_info()
        cap = getattr(info, "vmem_capacity_bytes", None)
        if cap:
            return int(cap)
    except Exception:
        pass
    return 128 * 1024 * 1024   # v5e/v6e default assumption


def _vmem_estimate(n_pad, tm, g_pad):
    """Conservative VMEM footprint (assume 2 pipeline buffers per input)."""
    a = 2 * tm * n_pad * 2            # A row tile(s), bf16
    x = 2 * n_pad * F_PAD * 2         # X, bf16
    w = 2 * F_PAD * F_PAD * 2         # W_l, bf16
    b = 2 * 1 * F_PAD * 4             # b_l, f32
    p = 2 * g_pad * tm * 4            # pool column tile, f32
    wl = 2 * F_PAD * F_PAD * 4        # W_lin, f32
    bl = 2 * 1 * F_PAD * 4            # b_lin, f32
    out = 2 * g_pad * F_PAD * 4       # logits, f32
    scratch = 2 * n_pad * F_PAD * 2 + g_pad * F_PAD * 4   # H + XW + pooled
    return a + x + w + b + p + wl + bl + out + scratch


# ----------------------------------------------------------------------------
# Fused kernel: 4 x (XW -> A @ XW + b -> tanh) -> mean-pool -> Linear
# ----------------------------------------------------------------------------
def _fused_gcn_kernel(a_ref, x_ref, w_ref, b_ref, p_ref, wl_ref, bl_ref,
                      o_ref, h_ref, xw_ref, pooled_ref, *, tm, num_layers):
    l = pl.program_id(0)              # layer index        (outer, sequential)
    i = pl.program_id(1)              # A row-tile index   (inner, sequential)
    n_tiles = pl.num_programs(1)
    last = num_layers - 1

    # Which row-block of A this grid step carries (serpentine across layers so
    # the boundary tile is reused; identical to i when n_tiles == 1).
    row_blk = jnp.where(l % 2 == 0, i, n_tiles - 1 - i)

    # -------- once per layer: XW = H_{l-1} @ W_l (layer 0 uses input X) -----
    @pl.when((l == 0) & (i == 0))
    def _():
        xw_ref[...] = jnp.dot(
            x_ref[...], w_ref[...], preferred_element_type=jnp.float32
        ).astype(xw_ref.dtype)

    @pl.when((l > 0) & (i == 0))
    def _():
        xw_ref[...] = jnp.dot(
            h_ref[...], w_ref[...], preferred_element_type=jnp.float32
        ).astype(xw_ref.dtype)

    # -------- message passing for this row tile: A_tile @ XW + b ------------
    agg = jnp.dot(a_ref[...], xw_ref[...], preferred_element_type=jnp.float32)
    out = agg + b_ref[...]                                   # f32 [tm, F_PAD]

    # Layers 0..2: tanh + store activations for the next layer.
    @pl.when(l < last)
    def _():
        row0 = pl.multiple_of(row_blk * tm, tm)
        h_ref[pl.ds(row0, tm), :] = jnp.tanh(out).astype(h_ref.dtype)

    # Last layer: no tanh, no H store; fold global mean pooling into the sweep.
    @pl.when((l == last) & (i == 0))
    def _():
        pooled_ref[...] = jnp.zeros_like(pooled_ref)

    @pl.when(l == last)
    def _():
        pooled_ref[...] += jnp.dot(p_ref[...], out,
                                   preferred_element_type=jnp.float32)

    # Epilogue after the last tile of the last layer: final Linear.
    @pl.when((l == last) & (i == n_tiles - 1))
    def _():
        logits = jnp.dot(pooled_ref[...], wl_ref[...],
                         preferred_element_type=jnp.float32) + bl_ref[...]
        # F.dropout(p=0.5, training=False) -> identity at inference.
        o_ref[...] = logits.astype(o_ref.dtype)


# ----------------------------------------------------------------------------
# Graph preprocessing (dense normalized adjacency, pooling matrix)
# ----------------------------------------------------------------------------
def build_normalized_adjacency(edge_index, num_nodes):
    # NOTE: .set() deduplicates repeated edges (PyG's scatter-add would count
    # multiplicity) -- host-side preprocessing detail.
    src, dst = edge_index[0], edge_index[1]
    a = jnp.zeros((num_nodes, num_nodes), jnp.float32)
    a = a.at[dst, src].set(1.0)                    # message flows src -> dst
    a = a + jnp.eye(num_nodes, dtype=jnp.float32)  # add self loops
    deg = a.sum(axis=1)
    dinv = jnp.where(deg > 0, 1.0 / jnp.sqrt(deg), 0.0)
    return dinv[:, None] * a * dinv[None, :]


def build_pool_matrix(batch, num_graphs):
    onehot = (batch[None, :] == jnp.arange(num_graphs)[:, None]).astype(jnp.float32)
    counts = jnp.clip(onehot.sum(axis=1, keepdims=True), 1.0, None)
    return onehot / counts                                         # [G, N]


# ----------------------------------------------------------------------------
# Parameter init (deterministic, glorot-like; GCNConv bias = 0 like PyG)
# ----------------------------------------------------------------------------
def glorot(key, fan_in, fan_out):
    lim = jnp.sqrt(6.0 / (fan_in + fan_out))
    return jax.random.uniform(key, (fan_in, fan_out), jnp.float32, -lim, lim)


def init_params(key, in_feat=8, h_feat=8, num_classes=4):
    ks = jax.random.split(key, 6)
    dims = [in_feat, h_feat, 2 * h_feat, 4 * h_feat, 8 * h_feat]
    params = {}
    for i in range(NUM_LAYERS):
        params[f"w{i+1}"] = glorot(ks[i], dims[i], dims[i + 1])
        params[f"b{i+1}"] = jnp.zeros((dims[i + 1],), jnp.float32)
    params["w_lin"] = glorot(ks[4], dims[4], num_classes)          # [F_in, C]
    lim = 1.0 / jnp.sqrt(dims[4])
    params["b_lin"] = jax.random.uniform(ks[5], (num_classes,), jnp.float32, -lim, lim)
    return params


# ----------------------------------------------------------------------------
# Forward pass (mirrors GCN.forward) -- single fused pallas_call
# ----------------------------------------------------------------------------
def gcn_forward(params, x, edge_index, batch, num_graphs):
    n, in_feat = x.shape
    num_classes = params["b_lin"].shape[0]

    a_norm = build_normalized_adjacency(edge_index, n)             # [N, N] f32
    pool = build_pool_matrix(batch, num_graphs)                    # [G, N] f32

    # ---- pad to TPU-friendly shapes (padding independent of tile size) ----
    n_pad = _round_up(n, N_QUANTUM)
    g_pad = _round_up(max(num_graphs, 8), 8)

    # ---- tile selection: resident A if it fits, else largest fitting tile --
    vmem_cap = _vmem_capacity_bytes()
    budget = int(vmem_cap * 0.80)
    if _vmem_estimate(n_pad, n_pad, g_pad) <= budget:
        tm = n_pad                                  # fully VMEM-resident A
    else:
        tm = 128
        for cand in (1024, 896, 768, 640, 512, 384, 256, 128):
            if n_pad % cand == 0 and _vmem_estimate(n_pad, cand, g_pad) <= budget:
                tm = cand
                break
    n_tiles = n_pad // tm
    vmem_needed = _vmem_estimate(n_pad, tm, g_pad)
    vmem_limit = min(int(vmem_cap * 0.9),
                     max(2 * vmem_needed + (4 << 20), 32 << 20))

    # ---- padded operands ---------------------------------------------------
    a_p = jnp.zeros((n_pad, n_pad), jnp.bfloat16).at[:n, :n].set(
        a_norm.astype(jnp.bfloat16))
    x_p = jnp.zeros((n_pad, F_PAD), jnp.bfloat16).at[:n, :in_feat].set(
        x.astype(jnp.bfloat16))
    p_p = jnp.zeros((g_pad, n_pad), jnp.float32).at[:num_graphs, :n].set(pool)

    w_stack = jnp.zeros((NUM_LAYERS, F_PAD, F_PAD), jnp.bfloat16)
    b_stack = jnp.zeros((NUM_LAYERS, 1, F_PAD), jnp.float32)
    for li in range(NUM_LAYERS):
        w = params[f"w{li+1}"]
        b = params[f"b{li+1}"]
        w_stack = w_stack.at[li, :w.shape[0], :w.shape[1]].set(w.astype(jnp.bfloat16))
        b_stack = b_stack.at[li, 0, :b.shape[0]].set(b)

    wl = params["w_lin"]
    wl_p = jnp.zeros((F_PAD, F_PAD), jnp.float32).at[:wl.shape[0], :wl.shape[1]].set(wl)
    bl_p = jnp.zeros((1, F_PAD), jnp.float32).at[0, :num_classes].set(params["b_lin"])

    # ---- index maps ----------------------------------------------------------
    if n_tiles == 1:
        a_map = lambda l, i: (0, 0)          # constant -> A DMA'd exactly once
        p_map = lambda l, i: (0, 0)
    else:
        def a_map(l, i):                     # serpentine over layers
            return (jnp.where(l % 2 == 0, i, n_tiles - 1 - i), 0)

        def p_map(l, i):                     # only streams on the last layer
            row = jnp.where(l % 2 == 0, i, n_tiles - 1 - i)
            return (0, jnp.where(l == NUM_LAYERS - 1, row, 0))

    a_spec_kwargs = {}
    if n_tiles >= 3:
        # Deeper buffering on the mem-bound A stream to hide layer-boundary DMA.
        a_spec_kwargs["pipeline_mode"] = pl.Buffered(3)

    grid = (NUM_LAYERS, n_tiles)
    kernel = functools.partial(_fused_gcn_kernel, tm=tm, num_layers=NUM_LAYERS)

    flops = (2 * n_pad * n_pad * F_PAD * NUM_LAYERS        # A @ XW per layer
             + 2 * n_pad * F_PAD * F_PAD * NUM_LAYERS      # H @ W per layer
             + 2 * g_pad * n_pad * F_PAD                   # mean pool
             + 2 * g_pad * F_PAD * F_PAD)                  # final Linear
    a_sweeps = 1 if n_tiles == 1 else NUM_LAYERS
    bytes_accessed = (a_p.size * 2 * a_sweeps + x_p.size * 2 + w_stack.size * 2
                      + b_stack.size * 4 + p_p.size * 4 + wl_p.size * 4
                      + bl_p.size * 4 + g_pad * F_PAD * 4)

    out_p = pl.pallas_call(
        kernel,
        out_shape=jax.ShapeDtypeStruct((g_pad, F_PAD), jnp.float32),
        grid_spec=pltpu.PrefetchScalarGridSpec(
            num_scalar_prefetch=0,
            grid=grid,
            in_specs=[
                # A_norm: resident (constant map) or streamed row tiles.
                pl.BlockSpec((tm, n_pad), a_map, **a_spec_kwargs),
                # X: only read at layer 0, fetched once (constant map).
                pl.BlockSpec((n_pad, F_PAD), lambda l, i: (0, 0)),
                # Per-layer weights / bias (leading dim squeezed out).
                pl.BlockSpec((pl.Squeezed(), F_PAD, F_PAD), lambda l, i: (l, 0, 0)),
                pl.BlockSpec((pl.Squeezed(), 1, F_PAD), lambda l, i: (l, 0, 0)),
                # Pool matrix: (g_pad, tm) column tiles, streamed only on the
                # last layer (constant block 0 otherwise).
                pl.BlockSpec((g_pad, tm), p_map),
                # Final Linear weights / bias (fetched once).
                pl.BlockSpec((F_PAD, F_PAD), lambda l, i: (0, 0)),
                pl.BlockSpec((1, F_PAD), lambda l, i: (0, 0)),
            ],
            out_specs=pl.BlockSpec((g_pad, F_PAD), lambda l, i: (0, 0)),
            scratch_shapes=[
                pltpu.VMEM((n_pad, F_PAD), jnp.bfloat16),   # H  (activations)
                pltpu.VMEM((n_pad, F_PAD), jnp.bfloat16),   # XW (per-layer)
                pltpu.VMEM((g_pad, F_PAD), jnp.float32),    # pooled accumulator
            ],
        ),
        compiler_params=pltpu.CompilerParams(
            # Layer l+1 reads all row tiles of layer l from shared VMEM
            # scratch, so both grid axes must run sequentially on one core.
            dimension_semantics=("arbitrary", "arbitrary"),
            vmem_limit_bytes=int(vmem_limit),
        ),
        cost_estimate=pl.CostEstimate(
            flops=int(flops),
            transcendentals=int(3 * n_pad * F_PAD),
            bytes_accessed=int(bytes_accessed)),
    )(a_p, x_p, w_stack, b_stack, p_p, wl_p, bl_p)

    return out_p[:num_graphs, :num_classes]


if __name__ == "__main__":
    key = jax.random.PRNGKey(0)
    k_x, k_e, k_p = jax.random.split(key, 3)

    num_nodes = 16
    num_edges = 40
    num_graphs = 2
    in_feat, h_feat, num_classes = 8, 8, 4

    x = jax.random.normal(k_x, (num_nodes, in_feat), jnp.float32)
    edge_index = jax.random.randint(k_e, (2, num_edges), 0, num_nodes, jnp.int32)
    batch = jnp.concatenate(
        [jnp.zeros((num_nodes // 2,), jnp.int32),
         jnp.ones((num_nodes - num_nodes // 2,), jnp.int32)]
    )

    params = init_params(k_p, in_feat=in_feat, h_feat=h_feat, num_classes=num_classes)

    out = gcn_forward(params, x, edge_index, batch, num_graphs)
    out = jax.block_until_ready(out)
    assert out.shape == (num_graphs, num_classes)
    assert bool(jnp.all(jnp.isfinite(out)))
    print("KERNEL_OK")
</pallas_src>

<mosaic_0001>
module attributes {stable_mosaic.version = 11 : i64} {
  func.func @_fused_gcn_kernel(%arg0: i32, %arg1: i32, %arg2: memref<128x128xbf16, #tpu.memory_space<vmem>>, %arg3: memref<128x128xbf16, #tpu.memory_space<vmem>>, %arg4: memref<1x128x128xbf16, #tpu.memory_space<vmem>>, %arg5: memref<1x1x128xf32, #tpu.memory_space<vmem>>, %arg6: memref<8x128xf32, #tpu.memory_space<vmem>>, %arg7: memref<128x128xf32, #tpu.memory_space<vmem>>, %arg8: memref<1x128xf32, #tpu.memory_space<vmem>>, %arg9: memref<8x128xf32, #tpu.memory_space<vmem>>, %arg10: memref<128x128xbf16, #tpu.memory_space<vmem>>, %arg11: memref<128x128xbf16, #tpu.memory_space<vmem>>, %arg12: memref<8x128xf32, #tpu.memory_space<vmem>>) attributes {dimension_semantics = [#tpu.dimension_semantics<arbitrary>, #tpu.dimension_semantics<arbitrary>], iteration_bounds = array<i64: 4, 1>, scalar_prefetch = 0 : i64, scratch_operands = 3 : i64, tpu.core_type = #tpu.core_type<tc>, window_params = [{pipeline_mode = #tpu.pipeline_mode<synchronous>, transform_indices = @transform_0, window_bounds = array<i64: 128, 128>}, {pipeline_mode = #tpu.pipeline_mode<synchronous>, transform_indices = @transform_1, window_bounds = array<i64: 128, 128>}, {transform_indices = @transform_2, window_bounds = array<i64: 1, 128, 128>}, {transform_indices = @transform_3, window_bounds = array<i64: 1, 1, 128>}, {pipeline_mode = #tpu.pipeline_mode<synchronous>, transform_indices = @transform_4, window_bounds = array<i64: 8, 128>}, {pipeline_mode = #tpu.pipeline_mode<synchronous>, transform_indices = @transform_5, window_bounds = array<i64: 128, 128>}, {pipeline_mode = #tpu.pipeline_mode<synchronous>, transform_indices = @transform_6, window_bounds = array<i64: 1, 128>}, {pipeline_mode = #tpu.pipeline_mode<synchronous>, transform_indices = @transform_7, window_bounds = array<i64: 8, 128>}]} {
    %c2_i32 = arith.constant 2 : i32
    %c0_i32 = arith.constant 0 : i32
    %0 = arith.cmpi eq, %c2_i32, %c0_i32 : i32
    %c1_i32 = arith.constant 1 : i32
    %1 = arith.select %0, %c1_i32, %c2_i32 : i32
    %2 = arith.remsi %arg0, %1 : i32
    %c0_i32_0 = arith.constant 0 : i32
    %3 = arith.cmpi ne, %2, %c0_i32_0 : i32
    %c0_i32_1 = arith.constant 0 : i32
    %4 = arith.cmpi slt, %2, %c0_i32_1 : i32
    %c0_i32_2 = arith.constant 0 : i32
    %5 = arith.cmpi slt, %1, %c0_i32_2 : i32
    %6 = arith.xori %4, %5 : i1
    %7 = arith.andi %6, %3 : i1
    %8 = arith.addi %2, %1 : i32
    %9 = arith.select %7, %8, %2 : i32
    %c0_i32_3 = arith.constant 0 : i32
    %10 = arith.cmpi eq, %9, %c0_i32_3 : i32
    %c0_i32_4 = arith.constant 0 : i32
    %11 = arith.subi %c0_i32_4, %arg1 : i32
    %12 = arith.select %10, %arg1, %11 : i32
    %c0_i32_5 = arith.constant 0 : i32
    %13 = arith.cmpi eq, %arg0, %c0_i32_5 : i32
    %c0_i32_6 = arith.constant 0 : i32
    %14 = arith.cmpi eq, %arg1, %c0_i32_6 : i32
    %15 = arith.andi %13, %14 : i1
    %16 = arith.extui %15 : i1 to i32
    %c0_i32_7 = arith.constant 0 : i32
    %17 = arith.cmpi ne, %16, %c0_i32_7 : i32
    scf.if %17 {
      %c0_26 = arith.constant 0 : index
      %c0_27 = arith.constant 0 : index
      %46 = vector.load %arg3[%c0_26, %c0_27] : memref<128x128xbf16, #tpu.memory_space<vmem>>, vector<128x128xbf16>
      %c0_28 = arith.constant 0 : index
      %c0_29 = arith.constant 0 : index
      %c0_30 = arith.constant 0 : index
      %47 = vector.load %arg4[%c0_28, %c0_29, %c0_30] : memref<1x128x128xbf16, #tpu.memory_space<vmem>>, vector<1x128x128xbf16>
      %48 = vector.shape_cast %47 : vector<1x128x128xbf16> to vector<128x128xbf16>
      %cst_31 = arith.constant dense<0.000000e+00> : vector<128x128xf32>
      %49 = tpu.matmul %46, %48, %cst_31 {dimension_numbers = #tpu.dot_dimension_numbers<[1], [0], [0], [1], [0, 0, 1, 1], [], []>} : vector<128x128xbf16>, vector<128x128xbf16>, vector<128x128xf32> -> vector<128x128xf32>
      %50 = arith.truncf %49 : vector<128x128xf32> to vector<128x128xbf16>
      %c0_32 = arith.constant 0 : index
      %c0_33 = arith.constant 0 : index
      %51 = vector.load %arg11[%c0_32, %c0_33] : memref<128x128xbf16, #tpu.memory_space<vmem>>, vector<128x128xbf16>
      tpu.vector_store %arg11[%c0_32, %c0_33], %50 {strides = array<i32>} : memref<128x128xbf16, #tpu.memory_space<vmem>>, vector<128x128xbf16>,
    } else {
    }
    %c0_i32_8 = arith.constant 0 : i32
    %18 = arith.cmpi sgt, %arg0, %c0_i32_8 : i32
    %c0_i32_9 = arith.constant 0 : i32
    %19 = arith.cmpi eq, %arg1, %c0_i32_9 : i32
    %20 = arith.andi %18, %19 : i1
    %21 = arith.extui %20 : i1 to i32
    %c0_i32_10 = arith.constant 0 : i32
    %22 = arith.cmpi ne, %21, %c0_i32_10 : i32
    scf.if %22 {
      %c0_26 = arith.constant 0 : index
      %c0_27 = arith.constant 0 : index
      %46 = vector.load %arg10[%c0_26, %c0_27] : memref<128x128xbf16, #tpu.memory_space<vmem>>, vector<128x128xbf16>
      %c0_28 = arith.constant 0 : index
      %c0_29 = arith.constant 0 : index
      %c0_30 = arith.constant 0 : index
      %47 = vector.load %arg4[%c0_28, %c0_29, %c0_30] : memref<1x128x128xbf16, #tpu.memory_space<vmem>>, vector<1x128x128xbf16>
      %48 = vector.shape_cast %47 : vector<1x128x128xbf16> to vector<128x128xbf16>
      %cst_31 = arith.constant dense<0.000000e+00> : vector<128x128xf32>
      %49 = tpu.matmul %46, %48, %cst_31 {dimension_numbers = #tpu.dot_dimension_numbers<[1], [0], [0], [1], [0, 0, 1, 1], [], []>} : vector<128x128xbf16>, vector<128x128xbf16>, vector<128x128xf32> -> vector<128x128xf32>
      %50 = arith.truncf %49 : vector<128x128xf32> to vector<128x128xbf16>
      %c0_32 = arith.constant 0 : index
      %c0_33 = arith.constant 0 : index
      %51 = vector.load %arg11[%c0_32, %c0_33] : memref<128x128xbf16, #tpu.memory_space<vmem>>, vector<128x128xbf16>
      tpu.vector_store %arg11[%c0_32, %c0_33], %50 {strides = array<i32>} : memref<128x128xbf16, #tpu.memory_space<vmem>>, vector<128x128xbf16>,
    } else {
    }
    %c0 = arith.constant 0 : index
    %c0_11 = arith.constant 0 : index
    %23 = vector.load %arg2[%c0, %c0_11] : memref<128x128xbf16, #tpu.memory_space<vmem>>, vector<128x128xbf16>
    %c0_12 = arith.constant 0 : index
    %c0_13 = arith.constant 0 : index
    %24 = vector.load %arg11[%c0_12, %c0_13] : memref<128x128xbf16, #tpu.memory_space<vmem>>, vector<128x128xbf16>
    %cst = arith.constant dense<0.000000e+00> : vector<128x128xf32>
    %25 = tpu.matmul %23, %24, %cst {dimension_numbers = #tpu.dot_dimension_numbers<[1], [0], [0], [1], [0, 0, 1, 1], [], []>} : vector<128x128xbf16>, vector<128x128xbf16>, vector<128x128xf32> -> vector<128x128xf32>
    %c0_14 = arith.constant 0 : index
    %c0_15 = arith.constant 0 : index
    %c0_16 = arith.constant 0 : index
    %26 = vector.load %arg5[%c0_14, %c0_15, %c0_16] : memref<1x1x128xf32, #tpu.memory_space<vmem>>, vector<1x1x128xf32>
    %27 = vector.shape_cast %26 : vector<1x1x128xf32> to vector<1x128xf32>
    %28 = vector.broadcast %27 : vector<1x128xf32> to vector<128x128xf32>
    %29 = arith.addf %25, %28 : vector<128x128xf32>
    %c3_i32 = arith.constant 3 : i32
    %30 = arith.cmpi slt, %arg0, %c3_i32 : i32
    %31 = arith.extui %30 : i1 to i32
    %c0_i32_17 = arith.constant 0 : i32
    %32 = arith.cmpi ne, %31, %c0_i32_17 : i32
    scf.if %32 {
      %c128_i32 = arith.constant 128 : i32
      %46 = arith.muli %12, %c128_i32 : i32
      %47 = tpu.assume_multiple %46, 128 : i32
      %48 = math.tanh %29 : vector<128x128xf32>
      %49 = arith.truncf %48 : vector<128x128xf32> to vector<128x128xbf16>
      %50 = arith.index_cast %47 : i32 to index
      %c0_26 = arith.constant 0 : index
      %51 = vector.load %arg10[%50, %c0_26] : memref<128x128xbf16, #tpu.memory_space<vmem>>, vector<128x128xbf16>
      tpu.vector_store %arg10[%50, %c0_26], %49 {strides = array<i32>} : memref<128x128xbf16, #tpu.memory_space<vmem>>, vector<128x128xbf16>,
    } else {
    }
    %c3_i32_18 = arith.constant 3 : i32
    %33 = arith.cmpi eq, %arg0, %c3_i32_18 : i32
    %c0_i32_19 = arith.constant 0 : i32
    %34 = arith.cmpi eq, %arg1, %c0_i32_19 : i32
    %35 = arith.andi %33, %34 : i1
    %36 = arith.extui %35 : i1 to i32
    %c0_i32_20 = arith.constant 0 : i32
    %37 = arith.cmpi ne, %36, %c0_i32_20 : i32
    scf.if %37 {
      %cst_26 = arith.constant 0.000000e+00 : f32
      %46 = vector.broadcast %cst_26 : f32 to vector<8x128xf32>
      %c0_27 = arith.constant 0 : index
      %c0_28 = arith.constant 0 : index
      %47 = vector.load %arg12[%c0_27, %c0_28] : memref<8x128xf32, #tpu.memory_space<vmem>>, vector<8x128xf32>
      tpu.vector_store %arg12[%c0_27, %c0_28], %46 {strides = array<i32>} : memref<8x128xf32, #tpu.memory_space<vmem>>, vector<8x128xf32>,
    } else {
    }
    %c3_i32_21 = arith.constant 3 : i32
    %38 = arith.cmpi eq, %arg0, %c3_i32_21 : i32
    %39 = arith.extui %38 : i1 to i32
    %c0_i32_22 = arith.constant 0 : i32
    %40 = arith.cmpi ne, %39, %c0_i32_22 : i32
    scf.if %40 {
      %c0_26 = arith.constant 0 : index
      %c0_27 = arith.constant 0 : index
      %46 = vector.load %arg12[%c0_26, %c0_27] : memref<8x128xf32, #tpu.memory_space<vmem>>, vector<8x128xf32>
      %c0_28 = arith.constant 0 : index
      %c0_29 = arith.constant 0 : index
      %47 = vector.load %arg6[%c0_28, %c0_29] : memref<8x128xf32, #tpu.memory_space<vmem>>, vector<8x128xf32>
      %cst_30 = arith.constant dense<0.000000e+00> : vector<8x128xf32>
      %48 = tpu.matmul %47, %29, %cst_30 {dimension_numbers = #tpu.dot_dimension_numbers<[1], [0], [0], [1], [0, 0, 1, 1], [], []>} : vector<8x128xf32>, vector<128x128xf32>, vector<8x128xf32> -> vector<8x128xf32>
      %49 = arith.addf %46, %48 : vector<8x128xf32>
      %c0_31 = arith.constant 0 : index
      %c0_32 = arith.constant 0 : index
      %50 = vector.load %arg12[%c0_31, %c0_32] : memref<8x128xf32, #tpu.memory_space<vmem>>, vector<8x128xf32>
      tpu.vector_store %arg12[%c0_31, %c0_32], %49 {strides = array<i32>} : memref<8x128xf32, #tpu.memory_space<vmem>>, vector<8x128xf32>,
    } else {
    }
    %c3_i32_23 = arith.constant 3 : i32
    %41 = arith.cmpi eq, %arg0, %c3_i32_23 : i32
    %c0_i32_24 = arith.constant 0 : i32
    %42 = arith.cmpi eq, %arg1, %c0_i32_24 : i32
    %43 = arith.andi %41, %42 : i1
    %44 = arith.extui %43 : i1 to i32
    %c0_i32_25 = arith.constant 0 : i32
    %45 = arith.cmpi ne, %44, %c0_i32_25 : i32
    scf.if %45 {
      %c0_26 = arith.constant 0 : index
      %c0_27 = arith.constant 0 : index
      %46 = vector.load %arg12[%c0_26, %c0_27] : memref<8x128xf32, #tpu.memory_space<vmem>>, vector<8x128xf32>
      %c0_28 = arith.constant 0 : index
      %c0_29 = arith.constant 0 : index
      %47 = vector.load %arg7[%c0_28, %c0_29] : memref<128x128xf32, #tpu.memory_space<vmem>>, vector<128x128xf32>
      %cst_30 = arith.constant dense<0.000000e+00> : vector<8x128xf32>
      %48 = tpu.matmul %46, %47, %cst_30 {dimension_numbers = #tpu.dot_dimension_numbers<[1], [0], [0], [1], [0, 0, 1, 1], [], []>} : vector<8x128xf32>, vector<128x128xf32>, vector<8x128xf32> -> vector<8x128xf32>
      %c0_31 = arith.constant 0 : index
      %c0_32 = arith.constant 0 : index
      %49 = vector.load %arg8[%c0_31, %c0_32] : memref<1x128xf32, #tpu.memory_space<vmem>>, vector<1x128xf32>
      %50 = vector.broadcast %49 : vector<1x128xf32> to vector<8x128xf32>
      %51 = arith.addf %48, %50 : vector<8x128xf32>
      %c0_33 = arith.constant 0 : index
      %c0_34 = arith.constant 0 : index
      %52 = vector.load %arg9[%c0_33, %c0_34] : memref<8x128xf32, #tpu.memory_space<vmem>>, vector<8x128xf32>
      tpu.vector_store %arg9[%c0_33, %c0_34], %51 {strides = array<i32>} : memref<8x128xf32, #tpu.memory_space<vmem>>, vector<8x128xf32>,
    } else {
    }
    return
  }
  func.func @transform_0(%arg0: i32, %arg1: i32) -> (i32, i32) {
    %c0_i32 = arith.constant 0 : i32
    %c0_i32_0 = arith.constant 0 : i32
    %c0_i32_1 = arith.constant 0 : i32
    return %c0_i32, %c0_i32_0 : i32, i32
  }
  func.func @transform_1(%arg0: i32, %arg1: i32) -> (i32, i32) {
    %c0_i32 = arith.constant 0 : i32
    %c0_i32_0 = arith.constant 0 : i32
    %c0_i32_1 = arith.constant 0 : i32
    return %c0_i32, %c0_i32_0 : i32, i32
  }
  func.func @transform_2(%arg0: i32, %arg1: i32) -> (i32, i32, i32) {
    %c0_i32 = arith.constant 0 : i32
    %c0_i32_0 = arith.constant 0 : i32
    %c0_i32_1 = arith.constant 0 : i32
    return %arg0, %c0_i32, %c0_i32_0 : i32, i32, i32
  }
  func.func @transform_3(%arg0: i32, %arg1: i32) -> (i32, i32, i32) {
    %c0_i32 = arith.constant 0 : i32
    %c0_i32_0 = arith.constant 0 : i32
    %c0_i32_1 = arith.constant 0 : i32
    return %arg0, %c0_i32, %c0_i32_0 : i32, i32, i32
  }
  func.func @transform_4(%arg0: i32, %arg1: i32) -> (i32, i32) {
    %c0_i32 = arith.constant 0 : i32
    %c0_i32_0 = arith.constant 0 : i32
    %c0_i32_1 = arith.constant 0 : i32
    return %c0_i32, %c0_i32_0 : i32, i32
  }
  func.func @transform_5(%arg0: i32, %arg1: i32) -> (i32, i32) {
    %c0_i32 = arith.constant 0 : i32
    %c0_i32_0 = arith.constant 0 : i32
    %c0_i32_1 = arith.constant 0 : i32
    return %c0_i32, %c0_i32_0 : i32, i32
  }
  func.func @transform_6(%arg0: i32, %arg1: i32) -> (i32, i32) {
    %c0_i32 = arith.constant 0 : i32
    %c0_i32_0 = arith.constant 0 : i32
    %c0_i32_1 = arith.constant 0 : i32
    return %c0_i32, %c0_i32_0 : i32, i32
  }
  func.func @transform_7(%arg0: i32, %arg1: i32) -> (i32, i32) {
    %c0_i32 = arith.constant 0 : i32
    %c0_i32_0 = arith.constant 0 : i32
    %c0_i32_1 = arith.constant 0 : i32
    return %c0_i32, %c0_i32_0 : i32, i32
  }
}

</mosaic_0001>

<llo_original>
// kernel: tpu_custom_call.1
$region0: #{tpu_custom_call.1}
  #allocation0 [shape = 'u32[]', space=smem, size = 0x4, offset = 0x4, fixed_abs, tag = 'smem constant byte address 0x4 - core index']
  #allocation1 [shape = 'u32[144,128]{1,0:T(1,128)}', space=vmem, size = 0x12000, scoped, tag = 'internal scratch']
  #allocation2 [shape = 'bf16[128,128]{1,0:T(16,128)(2,1)}', space=vmem, size = 0x8000, scoped, tag = 'scratch operand']
  #allocation3 [shape = 'bf16[128,128]{1,0:T(16,128)(2,1)}', space=vmem, size = 0x8000, scoped, tag = 'scratch operand']
  #allocation4 [shape = 'f32[8,128]{1,0:T(8,128)}', space=vmem, size = 0x1000, scoped, tag = 'scratch operand']
  %s0 = inlined_call_operand.hbm [shape: bf16[128,128], index: 0, kind: input, shape index: {}]
  %s1 = inlined_call_operand.hbm [shape: bf16[128,128], index: 1, kind: input, shape index: {}]
  %s2 = inlined_call_operand.hbm [shape: bf16[4,128,128], index: 2, kind: input, shape index: {}]
  %s3 = inlined_call_operand.vmem [shape: f32[4,1,128], index: 3, kind: input, shape index: {}]
  %s4 = inlined_call_operand.vmem [shape: f32[8,128], index: 4, kind: input, shape index: {}]
  %s5 = inlined_call_operand.hbm [shape: f32[128,128], index: 5, kind: input, shape index: {}]
  %s6 = inlined_call_operand.vmem [shape: f32[1,128], index: 6, kind: input, shape index: {}]
  %s7 = inlined_call_operand.hbm [shape: f32[8,128], index: 7, kind: output, shape index: {}]
  %s8 = sld [smem:[#allocation0]]
  $region101: #{tpu_custom_call.1} parent=0
    _
  %s10 = ssub.s32 1, %s8
  %s11 = scalar_select 0, %s10, %s8
  $region1: #{tpu_custom_call.1} parent=0
    #allocation5 [shape = 'u8[32768]{0}', space=vmem, size = 0x8000, scoped, tag = 'input window, operand 0, single buffered']
    #allocation6 [shape = 's32[2]{0}', space=sflag, size = 0x8, scoped, tag = 'scoped memory for tpu_custom_call.1']
    #allocation7 [shape = 's32[2]{0}', space=sflag, size = 0x8, scoped, tag = 'scoped memory for tpu_custom_call.1']
    #allocation8 [shape = 'u8[32768]{0}', space=vmem, size = 0x8000, scoped, tag = 'input window, operand 1, single buffered']
    #allocation9 [shape = 's32[1]{0}', space=sflag, size = 0x4, scoped, tag = 'scoped memory for tpu_custom_call.1']
    #allocation10 [shape = 'u8[65536]{0}', space=vmem, size = 0x10000, scoped, tag = 'input window, operand 2']
    #allocation11 [shape = 'u8[65536]{0}', space=vmem, size = 0x10000, scoped, tag = 'input window, operand 5, single buffered']
    #allocation12 [shape = 'u8[4096]{0}', space=vmem, size = 0x1000, scoped, tag = 'output window, operand 0, single buffered']
    %12 = vsyncpa [#allocation6], 0
    %13 = vsyncpa [#allocation9], 0
    %14 = vsyncpa [#allocation7], 0
    loop: start=0, step=1, limit=6
    $region2: #{tpu_custom_call.1} parent=1 // loop_pre_header
      _
    $region3: #{tpu_custom_call.1} parent=1 // loop_header
      %s16 = sphi 0, %s20
      %p17 = scmp.ge.s32.totalorder %s16, 6
      %s23 = sphi 0, %s35
      %s24 = sphi 0, %s31
      %s25 = sphi 0, %s23
      %s26 = sphi 0, %s24
      %s27 = sphi 0, %s25
      %s28 = sphi 0, %s26
      %s36 = sphi 0, %s36
      %s38 = sphi 0, %s36
      %s39 = sphi 0, %s38
      %s53 = sphi 0, %s39
      %s57 = sphi 0, %s57
      %s59 = sphi 0, %s57
      %s60 = sphi 0, %s59
      %s74 = sphi 0, %s60
      %s80 = sphi 0, %s82
      %s83 = sphi 0, %s80
      %s84 = sphi 0, %s83
      %s100 = sphi 0, %s84
      %s106 = sphi 0, %s108
      %s109 = sphi 0, %s106
      %s110 = sphi 0, %s109
      %s126 = sphi 0, %s110
      %s130 = sphi 0, %s130
      %s132 = sphi 0, %s130
      %s133 = sphi 0, %s132
      %s147 = sphi 0, %s133
      %s151 = sphi 0, %s151
      %s153 = sphi 0, %s151
      %s154 = sphi 0, %s153
      %s168 = sphi 0, %s154
      %s172 = sphi 0, %s172
      %s174 = sphi 0, %s172
      %s175 = sphi 0, %s174
      %s189 = sphi 0, %s175
      %s193 = sphi 0, %s193
      %s195 = sphi 0, %s193
      %s196 = sphi 0, %s195
      %s210 = sphi 0, %s196
    $region4: #{tpu_custom_call.1} parent=1 // loop_header_branch
      %19 = sbr.rel (%p17) target = $region8
    $region5: #{tpu_custom_call.1} parent=1 // loop_body
      %s21 = ssub.s32 %s16, 1
      %s22 = ssub.s32 %s16, 2
      %s29 = sadd.s32 1, %s24
      %p30 = scmp.ge.s32.totalorder %s29, 1
      %s31 = scalar_select %p30, 0, %s29
      %s32 = sadd.s32 1, %s23
      %s33 = scalar_select %p30, %s32, %s23
      %p34 = scmp.ge.s32.totalorder %s33, 4
      %s35 = scalar_select %p34, 0, %s33
      %s37 = sadd.s32 %s36, 1
      %p40 = scmp.eq.s32.totalorder %s16, 3
      %p41 = scmp.ne.s32.totalorder %s36, %s38
      %p42 = scmp.eq.s32.totalorder %s16, 0
      %p43 = por %p41, %p42
      %p44 = scmp.ne.s32.totalorder %s36, %s38
      %p45 = scmp.eq.s32.totalorder %s21, 3
      %p46 = por %p44, %p45
      %p47 = scmp.ne.s32.totalorder %s38, %s39
      %p48 = scmp.eq.s32.totalorder %s21, 0
      %p49 = por %p47, %p48
      %p50 = scmp.ne.s32.totalorder %s38, %s39
      %p51 = scmp.eq.s32.totalorder %s22, 3
      %p52 = por %p50, %p51
      %p54 = scmp.ne.s32.totalorder %s39, %s53
      %p55 = scmp.eq.s32.totalorder %s22, 0
      %p56 = por %p54, %p55
      %s58 = sadd.s32 %s57, 1
      %p61 = scmp.eq.s32.totalorder %s16, 3
      %p62 = scmp.ne.s32.totalorder %s57, %s59
      %p63 = scmp.eq.s32.totalorder %s16, 0
      %p64 = por %p62, %p63
      %p65 = scmp.ne.s32.totalorder %s57, %s59
      %p66 = scmp.eq.s32.totalorder %s21, 3
      %p67 = por %p65, %p66
      %p68 = scmp.ne.s32.totalorder %s59, %s60
      %p69 = scmp.eq.s32.totalorder %s21, 0
      %p70 = por %p68, %p69
      %p71 = scmp.ne.s32.totalorder %s59, %s60
      %p72 = scmp.eq.s32.totalorder %s22, 3
      %p73 = por %p71, %p72
      %p75 = scmp.ne.s32.totalorder %s60, %s74
      %p76 = scmp.eq.s32.totalorder %s22, 0
      %p77 = por %p75, %p76
      %s78 = ssub.s32 %s23, %s35
      %p79 = scmp.eq.s32.totalorder %s78, 0
      %s81 = sadd.s32 %s80, 1
      %s82 = scalar_select %p79, %s80, %s81
      %p85 = pneg %p79
      %p86 = scmp.eq.s32.totalorder %s16, 3
      %p87 = por %p85, %p86
      %p88 = scmp.ne.s32.totalorder %s80, %s83
      %p89 = scmp.eq.s32.totalorder %s16, 0
      %p90 = por %p88, %p89
      %p91 = scmp.ne.s32.totalorder %s80, %s83
      %p92 = scmp.eq.s32.totalorder %s21, 3
      %p93 = por %p91, %p92
      %p94 = scmp.ne.s32.totalorder %s83, %s84
      %p95 = scmp.eq.s32.totalorder %s21, 0
      %p96 = por %p94, %p95
      %p97 = scmp.ne.s32.totalorder %s83, %s84
      %p98 = scmp.eq.s32.totalorder %s22, 3
      %p99 = por %p97, %p98
      %p101 = scmp.ne.s32.totalorder %s84, %s100
      %p102 = scmp.eq.s32.totalorder %s22, 0
      %p103 = por %p101, %p102
      %s104 = ssub.s32 %s23, %s35
      %p105 = scmp.eq.s32.totalorder %s104, 0
      %s107 = sadd.s32 %s106, 1
      %s108 = scalar_select %p105, %s106, %s107
      %p111 = pneg %p105
      %p112 = scmp.eq.s32.totalorder %s16, 3
      %p113 = por %p111, %p112
      %p114 = scmp.ne.s32.totalorder %s106, %s109
      %p115 = scmp.eq.s32.totalorder %s16, 0
      %p116 = por %p114, %p115
      %p117 = scmp.ne.s32.totalorder %s106, %s109
      %p118 = scmp.eq.s32.totalorder %s21, 3
      %p119 = por %p117, %p118
      %p120 = scmp.ne.s32.totalorder %s109, %s110
      %p121 = scmp.eq.s32.totalorder %s21, 0
      %p122 = por %p120, %p121
      %p123 = scmp.ne.s32.totalorder %s109, %s110
      %p124 = scmp.eq.s32.totalorder %s22, 3
      %p125 = por %p123, %p124
      %p127 = scmp.ne.s32.totalorder %s110, %s126
      %p128 = scmp.eq.s32.totalorder %s22, 0
      %p129 = por %p127, %p128
      %s131 = sadd.s32 %s130, 1
      %p134 = scmp.eq.s32.totalorder %s16, 3
      %p135 = scmp.ne.s32.totalorder %s130, %s132
      %p136 = scmp.eq.s32.totalorder %s16, 0
      %p137 = por %p135, %p136
      %p138 = scmp.ne.s32.totalorder %s130, %s132
      %p139 = scmp.eq.s32.totalorder %s21, 3
      %p140 = por %p138, %p139
      %p141 = scmp.ne.s32.totalorder %s132, %s133
      %p142 = scmp.eq.s32.totalorder %s21, 0
      %p143 = por %p141, %p142
      %p144 = scmp.ne.s32.totalorder %s132, %s133
      %p145 = scmp.eq.s32.totalorder %s22, 3
      %p146 = por %p144, %p145
      %p148 = scmp.ne.s32.totalorder %s133, %s147
      %p149 = scmp.eq.s32.totalorder %s22, 0
      %p150 = por %p148, %p149
      %s152 = sadd.s32 %s151, 1
      %p155 = scmp.eq.s32.totalorder %s16, 3
      %p156 = scmp.ne.s32.totalorder %s151, %s153
      %p157 = scmp.eq.s32.totalorder %s16, 0
      %p158 = por %p156, %p157
      %p159 = scmp.ne.s32.totalorder %s151, %s153
      %p160 = scmp.eq.s32.totalorder %s21, 3
      %p161 = por %p159, %p160
      %p162 = scmp.ne.s32.totalorder %s153, %s154
      %p163 = scmp.eq.s32.totalorder %s21, 0
      %p164 = por %p162, %p163
      %p165 = scmp.ne.s32.totalorder %s153, %s154
      %p166 = scmp.eq.s32.totalorder %s22, 3
      %p167 = por %p165, %p166
      %p169 = scmp.ne.s32.totalorder %s154, %s168
      %p170 = scmp.eq.s32.totalorder %s22, 0
      %p171 = por %p169, %p170
      %s173 = sadd.s32 %s172, 1
      %p176 = scmp.eq.s32.totalorder %s16, 3
      %p177 = scmp.ne.s32.totalorder %s172, %s174
      %p178 = scmp.eq.s32.totalorder %s16, 0
      %p179 = por %p177, %p178
      %p180 = scmp.ne.s32.totalorder %s172, %s174
      %p181 = scmp.eq.s32.totalorder %s21, 3
      %p182 = por %p180, %p181
      %p183 = scmp.ne.s32.totalorder %s174, %s175
      %p184 = scmp.eq.s32.totalorder %s21, 0
      %p185 = por %p183, %p184
      %p186 = scmp.ne.s32.totalorder %s174, %s175
      %p187 = scmp.eq.s32.totalorder %s22, 3
      %p188 = por %p186, %p187
      %p190 = scmp.ne.s32.totalorder %s175, %s189
      %p191 = scmp.eq.s32.totalorder %s22, 0
      %p192 = por %p190, %p191
      %s194 = sadd.s32 %s193, 1
      %p197 = scmp.eq.s32.totalorder %s16, 3
      %p198 = scmp.ne.s32.totalorder %s193, %s195
      %p199 = scmp.eq.s32.totalorder %s16, 0
      %p200 = por %p198, %p199
      %p201 = scmp.ne.s32.totalorder %s193, %s195
      %p202 = scmp.eq.s32.totalorder %s21, 3
      %p203 = por %p201, %p202
      %p204 = scmp.ne.s32.totalorder %s195, %s196
      %p205 = scmp.eq.s32.totalorder %s21, 0
      %p206 = por %p204, %p205
      %p207 = scmp.ne.s32.totalorder %s195, %s196
      %p208 = scmp.eq.s32.totalorder %s22, 3
      %p209 = por %p207, %p208
      %p211 = scmp.ne.s32.totalorder %s196, %s210
      %p212 = scmp.eq.s32.totalorder %s22, 0
      %p213 = por %p211, %p212
      %p214 = scmp.le.s32.totalorder 1, %s16
      %p215 = scmp.lt.s32.totalorder %s16, 5
      %p216 = pnand %p214, %p215
      %p217 = pneg %p216
      // Predicated region
      $region9: #{tpu_custom_call.1} parent=5 // pred_check
        _
      $region10: #{tpu_custom_call.1} parent=5 // pred_check_branch
        %219 = sbr.rel (%p216) target = $region12
      $region11: #{tpu_custom_call.1} parent=5 // pred_region
        %s220 = ssub.s32 %s16, 1
        // Predicated region
        $region13: #{tpu_custom_call.1} parent=11 // pred_check
          %p221 = pneg %p49
        $region14: #{tpu_custom_call.1} parent=11 // pred_check_branch
          %223 = sbr.rel (%p221) target = $region16
        $region15: #{tpu_custom_call.1} parent=11 // pred_region
          %s225 = ssub.s32 1024, 1024
          %226 = vsyncadd [#allocation6], %s225
          %s227 = sshll.u32 [#allocation5], 4
          %s228 = int_to_ptr.vmem [resolvable:$true] %s227
          %233 = dma.hbm_to_vmem [thread:$0]  %s0, 1024, %s228, [#allocation6], 64, 64, 4
        $region16: #{tpu_custom_call.1} parent=11 // pred_fallthru
          _
        // Predicated region
        $region17: #{tpu_custom_call.1} parent=11 // pred_check
          %p234 = pneg %p70
        $region18: #{tpu_custom_call.1} parent=11 // pred_check_branch
          %236 = sbr.rel (%p234) target = $region20
        $region19: #{tpu_custom_call.1} parent=11 // pred_region
          %s238 = ssub.s32 1024, 1024
          %239 = vsyncadd [#allocation9], %s238
          %s240 = sshll.u32 [#allocation8], 4
          %s241 = int_to_ptr.vmem [resolvable:$true] %s240
          %246 = dma.hbm_to_vmem [thread:$0]  %s1, 1024, %s241, [#allocation9], 64, 64, 4
        $region20: #{tpu_custom_call.1} parent=11 // pred_fallthru
          _
        // Predicated region
        $region21: #{tpu_custom_call.1} parent=11 // pred_check
          %p247 = pneg %p143
        $region22: #{tpu_custom_call.1} parent=11 // pred_check_branch
          %249 = sbr.rel (%p247) target = $region24
        $region23: #{tpu_custom_call.1} parent=11 // pred_region
          _
        $region24: #{tpu_custom_call.1} parent=11 // pred_fallthru
          _
        // Predicated region
        $region25: #{tpu_custom_call.1} parent=11 // pred_check
          %p250 = pneg %p164
        $region26: #{tpu_custom_call.1} parent=11 // pred_check_branch
          %252 = sbr.rel (%p250) target = $region28
        $region27: #{tpu_custom_call.1} parent=11 // pred_region
          %s254 = ssub.s32 2048, 2048
          %255 = vsyncadd [#allocation9], %s254
          %s256 = sshll.u32 [#allocation11], 4
          %s257 = int_to_ptr.vmem [resolvable:$true] %s256
          %262 = dma.hbm_to_vmem [thread:$0]  %s5, 2048, %s257, [#allocation9], 128, 128, 8
        $region28: #{tpu_custom_call.1} parent=11 // pred_fallthru
          _
        // Predicated region
        $region29: #{tpu_custom_call.1} parent=11 // pred_check
          %p263 = pneg %p185
        $region30: #{tpu_custom_call.1} parent=11 // pred_check_branch
          %265 = sbr.rel (%p263) target = $region32
        $region31: #{tpu_custom_call.1} parent=11 // pred_region
          _
        $region32: #{tpu_custom_call.1} parent=11 // pred_fallthru
          _
      $region12: #{tpu_custom_call.1} parent=5 // pred_fallthru
        _
      %p266 = scmp.lt.s32.totalorder %s16, 4
      // Predicated region
      $region33: #{tpu_custom_call.1} parent=5 // pred_check
        %p267 = pneg %p266
      $region34: #{tpu_custom_call.1} parent=5 // pred_check_branch
        %269 = sbr.rel (%p267) target = $region36
      $region35: #{tpu_custom_call.1} parent=5 // pred_region
        // Predicated region
        $region37: #{tpu_custom_call.1} parent=35 // pred_check
          %p270 = pneg %p90
        $region38: #{tpu_custom_call.1} parent=35 // pred_check_branch
          %272 = sbr.rel (%p270) target = $region40
        $region39: #{tpu_custom_call.1} parent=35 // pred_region
          %s273 = sand.u32 %s16, 1
          %s274 = scalar_lea.sflag [#allocation6], %s273
          %s275 = sand.u32 %s80, 1
          %s276 = smul.addr %s275, 64
          %s277 = scalar_lea.vmem [#allocation10], %s276
          %s279 = ssub.s32 1024, 1024
          %280 = vsyncadd %s274, %s279
          %s281 = smul.addr %s23, 16
          %s282 = smul.addr %s281, 64
          %s283 = scalar_lea.hbm %s2, %s282
          %s284 = sshll.u32 %s277, 4
          %s285 = int_to_ptr.vmem [resolvable:$true] %s284
          %290 = dma.hbm_to_vmem [thread:$0]  %s283, 1024, %s285, %s274, 64, 64, 4
        $region40: #{tpu_custom_call.1} parent=35 // pred_fallthru
          _
        // Predicated region
        $region41: #{tpu_custom_call.1} parent=35 // pred_check
          %p291 = pneg %p116
        $region42: #{tpu_custom_call.1} parent=35 // pred_check_branch
          %293 = sbr.rel (%p291) target = $region44
        $region43: #{tpu_custom_call.1} parent=35 // pred_region
          %p294 = scmp.lt.s32.totalorder %s23, 3
          %s295 = scalar_select %p294, %s23, 3
          %s296 = scalar_lea.vmem %s3, %s295
        $region44: #{tpu_custom_call.1} parent=35 // pred_fallthru
          _
      $region36: #{tpu_custom_call.1} parent=5 // pred_fallthru
        _
      %p297 = scmp.le.s32.totalorder 1, %s16
      %p298 = scmp.lt.s32.totalorder %s16, 5
      %p299 = pnand %p297, %p298
      %p300 = pneg %p299
      // Predicated region
      $region45: #{tpu_custom_call.1} parent=5 // pred_check
        _
      $region46: #{tpu_custom_call.1} parent=5 // pred_check_branch
        %302 = sbr.rel (%p299) target = $region48
      $region47: #{tpu_custom_call.1} parent=5 // pred_region
        %s303 = ssub.s32 %s16, 1
        // Predicated region
        $region49: #{tpu_custom_call.1} parent=47 // pred_check
          %p304 = pneg %p49
        $region50: #{tpu_custom_call.1} parent=47 // pred_check_branch
          %306 = sbr.rel (%p304) target = $region52
        $region51: #{tpu_custom_call.1} parent=47 // pred_region
          %307 = dma.done [#allocation6], 1024
        $region52: #{tpu_custom_call.1} parent=47 // pred_fallthru
          _
        // Predicated region
        $region53: #{tpu_custom_call.1} parent=47 // pred_check
          %p308 = pneg %p70
        $region54: #{tpu_custom_call.1} parent=47 // pred_check_branch
          %310 = sbr.rel (%p308) target = $region56
        $region55: #{tpu_custom_call.1} parent=47 // pred_region
          %311 = dma.done [#allocation9], 1024
        $region56: #{tpu_custom_call.1} parent=47 // pred_fallthru
          _
        %s312 = sand.u32 %s21, 1
        %s313 = scalar_lea.sflag [#allocation6], %s312
        %s314 = sand.u32 %s83, 1
        %s315 = smul.addr %s314, 64
        %s316 = scalar_lea.vmem [#allocation10], %s315
        // Predicated region
        $region57: #{tpu_custom_call.1} parent=47 // pred_check
          %p317 = pneg %p96
        $region58: #{tpu_custom_call.1} parent=47 // pred_check_branch
          %319 = sbr.rel (%p317) target = $region60
        $region59: #{tpu_custom_call.1} parent=47 // pred_region
          %320 = dma.done %s313, 1024
        $region60: #{tpu_custom_call.1} parent=47 // pred_fallthru
          _
        // Predicated region
        $region61: #{tpu_custom_call.1} parent=47 // pred_check
          %p321 = pneg %p164
        $region62: #{tpu_custom_call.1} parent=47 // pred_check_branch
          %323 = sbr.rel (%p321) target = $region64
        $region63: #{tpu_custom_call.1} parent=47 // pred_region
          %324 = dma.done [#allocation9], 2048
        $region64: #{tpu_custom_call.1} parent=47 // pred_fallthru
          _
        %p325 = pneg %p49
        %p326 = pneg %p46
        %p327 = pneg %p70
        %p328 = pneg %p67
        %s329 = sand.u32 %s21, 1
        %s330 = scalar_lea.sflag [#allocation6], %s329
        %s331 = sand.u32 %s83, 1
        %s332 = smul.addr %s331, 64
        %s333 = scalar_lea.vmem [#allocation10], %s332
        %p334 = pneg %p96
        %p335 = pneg %p93
        %p336 = scmp.lt.s32.totalorder %s25, 3
        %s337 = scalar_select %p336, %s25, 3
        %s338 = scalar_lea.vmem %s3, %s337
        %p339 = pneg %p122
        %p340 = pneg %p119
        %p341 = pneg %p143
        %p342 = pneg %p140
        %p343 = pneg %p164
        %p344 = pneg %p161
        %p345 = pneg %p185
        %p346 = pneg %p182
        %p347 = pneg %p206
        %p348 = pneg %p203
        %p349 = scmp.lt.s32.totalorder %s25, 3
        %s350 = scalar_select %p349, %s25, 3
        %s351 = scalar_lea.vmem %s3, %s350
        %p353 = scmp.lt.s32.totalorder %s25, 0
        %s354 = ssub.s32 0, %s25
        %s355 = scalar_select %p353, %s354, %s25
        %s356 = sand.u32 %s355, 1
        %s357 = ssub.s32 0, %s356
        %s358 = scalar_select %p353, %s357, %s356
        %p359 = scmp.ne.s32.totalorder %s358, 0
        %p360 = scmp.lt.s32.totalorder %s358, 0
        %p361 = pnand %p360, %p359
        %p362 = pneg %p361
        %s363 = sadd.s32 %s358, 2
        %s364 = scalar_select %p362, %s363, %s358
        %p365 = scmp.eq.s32.totalorder %s364, 0
        %s366 = ssub.s32 0, %s26
        %s367 = scalar_select %p365, %s26, %s366
        %p368 = scmp.eq.s32.totalorder %s25, 0
        %p369 = scmp.eq.s32.totalorder %s26, 0
        %p370 = pnand %p368, %p369
        %p371 = pneg %p370
        // Predicated region
        $region65: #{tpu_custom_call.1} parent=47 // pred_check
          _
        $region66: #{tpu_custom_call.1} parent=47 // pred_check_branch
          %373 = sbr.rel (%p370) target = $region68
        $region67: #{tpu_custom_call.1} parent=47 // pred_region
          %v374 = vld [vmem:[#allocation8] sm:$0xf]
          %v375 = vld [vmem:[#allocation8 + $0x4] sm:$0xf]
          %v376 = vld [vmem:[#allocation8 + $0x8] sm:$0xf]
          %v377 = vld [vmem:[#allocation8 + $0xc] sm:$0xf]
          %v378 = vld [vmem:[#allocation8 + $0x10] sm:$0xf]
          %v379 = vld [vmem:[#allocation8 + $0x14] sm:$0xf]
          %v380 = vld [vmem:[#allocation8 + $0x18] sm:$0xf]
          %v381 = vld [vmem:[#allocation8 + $0x1c] sm:$0xf]
          %v382 = vld [vmem:[#allocation8 + $0x20] sm:$0xf]
          %v383 = vld [vmem:[#allocation8 + $0x24] sm:$0xf]
          %v384 = vld [vmem:[#allocation8 + $0x28] sm:$0xf]
          %v385 = vld [vmem:[#allocation8 + $0x2c] sm:$0xf]
          %v386 = vld [vmem:[#allocation8 + $0x30] sm:$0xf]
          %v387 = vld [vmem:[#allocation8 + $0x34] sm:$0xf]
          %v388 = vld [vmem:[#allocation8 + $0x38] sm:$0xf]
          %v389 = vld [vmem:[#allocation8 + $0x3c] sm:$0xf]
          %v390 = vld [vmem:[%s316] sm:$0xf]
          %v391 = vld [vmem:[%s316 + $0x4] sm:$0xf]
          %v392 = vld [vmem:[%s316 + $0x8] sm:$0xf]
          %v393 = vld [vmem:[%s316 + $0xc] sm:$0xf]
          %v394 = vld [vmem:[%s316 + $0x10] sm:$0xf]
          %v395 = vld [vmem:[%s316 + $0x14] sm:$0xf]
          %v396 = vld [vmem:[%s316 + $0x18] sm:$0xf]
          %v397 = vld [vmem:[%s316 + $0x1c] sm:$0xf]
          %v398 = vld [vmem:[%s316 + $0x20] sm:$0xf]
          %v399 = vld [vmem:[%s316 + $0x24] sm:$0xf]
          %v400 = vld [vmem:[%s316 + $0x28] sm:$0xf]
          %v401 = vld [vmem:[%s316 + $0x2c] sm:$0xf]
          %v402 = vld [vmem:[%s316 + $0x30] sm:$0xf]
          %v403 = vld [vmem:[%s316 + $0x34] sm:$0xf]
          %v404 = vld [vmem:[%s316 + $0x38] sm:$0xf]
          %v405 = vld [vmem:[%s316 + $0x3c] sm:$0xf]
          %v422 = vunpack.c.l.b16 %v374
          %v423 = vunpack.c.l.b16 %v375
          %v424 = vunpack.c.l.b16 %v376
          %v425 = vunpack.c.l.b16 %v377
          %v426 = vunpack.c.l.b16 %v378
          %v427 = vunpack.c.l.b16 %v379
          %v428 = vunpack.c.l.b16 %v380
          %v429 = vunpack.c.l.b16 %v381
          %v430 = vunpack.c.l.b16 %v382
          %v431 = vunpack.c.l.b16 %v383
          %v432 = vunpack.c.l.b16 %v384
          %v433 = vunpack.c.l.b16 %v385
          %v434 = vunpack.c.l.b16 %v386
          %v435 = vunpack.c.l.b16 %v387
          %v436 = vunpack.c.l.b16 %v388
          %v437 = vunpack.c.l.b16 %v389
          %v438 = vpack.c.b16 %v423, %v422
          %v439 = vpack.c.b16 %v425, %v424
          %v440 = vpack.c.b16 %v427, %v426
          %v441 = vpack.c.b16 %v429, %v428
          %v442 = vpack.c.b16 %v431, %v430
          %v443 = vpack.c.b16 %v433, %v432
          %v444 = vpack.c.b16 %v435, %v434
          %v445 = vpack.c.b16 %v437, %v436
          %v470 = vunpack.c.l.b16 %v390
          %v471 = vunpack.c.l.b16 %v391
          %v472 = vunpack.c.l.b16 %v392
          %v473 = vunpack.c.l.b16 %v393
          %v474 = vunpack.c.l.b16 %v394
          %v475 = vunpack.c.l.b16 %v395
          %v476 = vunpack.c.l.b16 %v396
          %v477 = vunpack.c.l.b16 %v397
          %v478 = vunpack.c.l.b16 %v398
          %v479 = vunpack.c.l.b16 %v399
          %v480 = vunpack.c.l.b16 %v400
          %v481 = vunpack.c.l.b16 %v401
          %v482 = vunpack.c.l.b16 %v402
          %v483 = vunpack.c.l.b16 %v403
          %v484 = vunpack.c.l.b16 %v404
          %v485 = vunpack.c.l.b16 %v405
          %v486 = vpack.c.b16 %v471, %v470
          %v487 = vpack.c.b16 %v473, %v472
          %v488 = vpack.c.b16 %v475, %v474
          %v489 = vpack.c.b16 %v477, %v476
          %v490 = vpack.c.b16 %v479, %v478
          %v491 = vpack.c.b16 %v481, %v480
          %v492 = vpack.c.b16 %v483, %v482
          %v493 = vpack.c.b16 %v485, %v484
          %502 = vmatprep.subr.bf16.mxu0 0
          %503 = vmatpush1.bf16.msra.mxu0 %v486
          %504 = vmatprep.subr.bf16.mxu0 0
          %505 = vmatpush1.bf16.msra.mxu0 %v487
          %506 = vmatprep.subr.bf16.mxu0 0
          %507 = vmatpush1.bf16.msra.mxu0 %v488
          %508 = vmatprep.subr.bf16.mxu0 0
          %509 = vmatpush1.bf16.msra.mxu0 %v489
          %510 = vmatprep.subr.bf16.mxu0 0
          %511 = vmatpush1.bf16.msra.mxu0 %v490
          %512 = vmatprep.subr.bf16.mxu0 0
          %513 = vmatpush1.bf16.msra.mxu0 %v491
          %514 = vmatprep.subr.bf16.mxu0 0
          %515 = vmatpush1.bf16.msra.mxu0 %v492
          %516 = vmatprep.subr.bf16.mxu0 0
          %517 = vmatpush1.bf16.msra.mxu0 %v493
          %518 = vmatprep.subr.bf16.mxu0 0
          %519 = vmatpush1.bf16.msra.mxu0 0
          %520 = vmatprep.subr.bf16.mxu0 0
          %521 = vmatpush1.bf16.msra.mxu0 0
          %522 = vmatprep.subr.bf16.mxu0 0
          %523 = vmatpush1.bf16.msra.mxu0 0
          %524 = vmatprep.subr.bf16.mxu0 0
          %525 = vmatpush1.bf16.msra.mxu0 0
          %526 = vmatprep.subr.bf16.mxu0 0
          %527 = vmatpush1.bf16.msra.mxu0 0
          %528 = vmatprep.subr.bf16.mxu0 0
          %529 = vmatpush1.bf16.msra.mxu0 0
          %530 = vmatprep.subr.bf16.mxu0 0
          %531 = vmatpush1.bf16.msra.mxu0 0
          %532 = vmatprep.subr.bf16.mxu0 0
          %533 = vmatpush1.bf16.msra.mxu0 0
          %534 = vmatprep.mubr.bf16.mxu0 0
          %535 = vmatmul.mubr.bf16.gmra.mrb[0].mxu0 %v438
          %v536 = vpop.f32.mrb[0].mxu0
          %v537 = vadd.f32 0.0, %v536
          %v538 = vpop.f32.mrb[0].mxu0
          %v539 = vpop.f32.mrb[0].mxu0
          %v540 = vadd.f32 0.0, %v539
          %v541 = vpop.f32.mrb[0].mxu0
          %542 = vmatprep.mubr.bf16.mxu0 0
          %543 = vmatmul.mubr.bf16.gmra.mrb[0].mxu0 %v439
          %v544 = vpop.f32.mrb[0].mxu0
          %v545 = vadd.f32 0.0, %v544
          %v546 = vpop.f32.mrb[0].mxu0
          %v547 = vpop.f32.mrb[0].mxu0
          %v548 = vadd.f32 0.0, %v547
          %v549 = vpop.f32.mrb[0].mxu0
          %550 = vmatprep.mubr.bf16.mxu0 0
          %551 = vmatmul.mubr.bf16.gmra.mrb[0].mxu0 %v440
          %v552 = vpop.f32.mrb[0].mxu0
          %v553 = vadd.f32 0.0, %v552
          %v554 = vpop.f32.mrb[0].mxu0
          %v555 = vpop.f32.mrb[0].mxu0
          %v556 = vadd.f32 0.0, %v555
          %v557 = vpop.f32.mrb[0].mxu0
          %558 = vmatprep.mubr.bf16.mxu0 0
          %559 = vmatmul.mubr.bf16.gmra.mrb[0].mxu0 %v441
          %v560 = vpop.f32.mrb[0].mxu0
          %v561 = vadd.f32 0.0, %v560
          %v562 = vpop.f32.mrb[0].mxu0
          %v563 = vpop.f32.mrb[0].mxu0
          %v564 = vadd.f32 0.0, %v563
          %v565 = vpop.f32.mrb[0].mxu0
          %566 = vmatprep.mubr.bf16.mxu0 0
          %567 = vmatmul.mubr.bf16.gmra.mrb[0].mxu0 %v442
          %v568 = vpop.f32.mrb[0].mxu0
          %v569 = vadd.f32 0.0, %v568
          %v570 = vpop.f32.mrb[0].mxu0
          %v571 = vpop.f32.mrb[0].mxu0
          %v572 = vadd.f32 0.0, %v571
          %v573 = vpop.f32.mrb[0].mxu0
          %574 = vmatprep.mubr.bf16.mxu0 0
          %575 = vmatmul.mubr.bf16.gmra.mrb[0].mxu0 %v443
          %v576 = vpop.f32.mrb[0].mxu0
          %v577 = vadd.f32 0.0, %v576
          %v578 = vpop.f32.mrb[0].mxu0
          %v579 = vpop.f32.mrb[0].mxu0
          %v580 = vadd.f32 0.0, %v579
          %v581 = vpop.f32.mrb[0].mxu0
          %582 = vmatprep.mubr.bf16.mxu0 0
          %583 = vmatmul.mubr.bf16.gmra.mrb[0].mxu0 %v444
          %v584 = vpop.f32.mrb[0].mxu0
          %v585 = vadd.f32 0.0, %v584
          %v586 = vpop.f32.mrb[0].mxu0
          %v587 = vpop.f32.mrb[0].mxu0
          %v588 = vadd.f32 0.0, %v587
          %v589 = vpop.f32.mrb[0].mxu0
          %590 = vmatprep.mubr.bf16.mxu0 0
          %591 = vmatmul.mubr.bf16.gmra.mrb[0].mxu0 %v445
          %v592 = vpop.f32.mrb[0].mxu0
          %v593 = vadd.f32 0.0, %v592
          %v594 = vpop.f32.mrb[0].mxu0
          %v595 = vpop.f32.mrb[0].mxu0
          %v596 = vadd.f32 0.0, %v595
          %v597 = vpop.f32.mrb[0].mxu0
          %598 = vdwg.mxu0
          %v599 = vpack.c.bf16 %v540, %v537
          %v600 = vpack.c.bf16 %v548, %v545
          %v601 = vpack.c.bf16 %v556, %v553
          %v602 = vpack.c.bf16 %v564, %v561
          %v603 = vpack.c.bf16 %v572, %v569
          %v604 = vpack.c.bf16 %v580, %v577
          %v605 = vpack.c.bf16 %v588, %v585
          %v606 = vpack.c.bf16 %v596, %v593
          %607 = vst [vmem:[#allocation3] sm:$0xff] %v599
          %608 = vst [vmem:[#allocation3 + $0x8] sm:$0xff] %v600
          %609 = vst [vmem:[#allocation3 + $0x10] sm:$0xff] %v601
          %610 = vst [vmem:[#allocation3 + $0x18] sm:$0xff] %v602
          %611 = vst [vmem:[#allocation3 + $0x20] sm:$0xff] %v603
          %612 = vst [vmem:[#allocation3 + $0x28] sm:$0xff] %v604
          %613 = vst [vmem:[#allocation3 + $0x30] sm:$0xff] %v605
          %614 = vst [vmem:[#allocation3 + $0x38] sm:$0xff] %v606
        $region68: #{tpu_custom_call.1} parent=47 // pred_fallthru
          _
        %p615 = scmp.gt.s32.totalorder %s25, 0
        %p616 = pnand %p615, %p369
        %p617 = pneg %p616
        // Predicated region
        $region69: #{tpu_custom_call.1} parent=47 // pred_check
          _
        $region70: #{tpu_custom_call.1} parent=47 // pred_check_branch
          %619 = sbr.rel (%p616) target = $region72
        $region71: #{tpu_custom_call.1} parent=47 // pred_region
          %v620 = vld [vmem:[#allocation2] sm:$0xff]
          %v621 = vld [vmem:[#allocation2 + $0x8] sm:$0xff]
          %v622 = vld [vmem:[#allocation2 + $0x10] sm:$0xff]
          %v623 = vld [vmem:[#allocation2 + $0x18] sm:$0xff]
          %v624 = vld [vmem:[#allocation2 + $0x20] sm:$0xff]
          %v625 = vld [vmem:[#allocation2 + $0x28] sm:$0xff]
          %v626 = vld [vmem:[#allocation2 + $0x30] sm:$0xff]
          %v627 = vld [vmem:[#allocation2 + $0x38] sm:$0xff]
          %v628 = vld [vmem:[%s316] sm:$0xf]
          %v629 = vld [vmem:[%s316 + $0x4] sm:$0xf]
          %v630 = vld [vmem:[%s316 + $0x8] sm:$0xf]
          %v631 = vld [vmem:[%s316 + $0xc] sm:$0xf]
          %v632 = vld [vmem:[%s316 + $0x10] sm:$0xf]
          %v633 = vld [vmem:[%s316 + $0x14] sm:$0xf]
          %v634 = vld [vmem:[%s316 + $0x18] sm:$0xf]
          %v635 = vld [vmem:[%s316 + $0x1c] sm:$0xf]
          %v636 = vld [vmem:[%s316 + $0x20] sm:$0xf]
          %v637 = vld [vmem:[%s316 + $0x24] sm:$0xf]
          %v638 = vld [vmem:[%s316 + $0x28] sm:$0xf]
          %v639 = vld [vmem:[%s316 + $0x2c] sm:$0xf]
          %v640 = vld [vmem:[%s316 + $0x30] sm:$0xf]
          %v641 = vld [vmem:[%s316 + $0x34] sm:$0xf]
          %v642 = vld [vmem:[%s316 + $0x38] sm:$0xf]
          %v643 = vld [vmem:[%s316 + $0x3c] sm:$0xf]
          %v660 = vunpack.c.l.b16 %v628
          %v661 = vunpack.c.l.b16 %v629
          %v662 = vunpack.c.l.b16 %v630
          %v663 = vunpack.c.l.b16 %v631
          %v664 = vunpack.c.l.b16 %v632
          %v665 = vunpack.c.l.b16 %v633
          %v666 = vunpack.c.l.b16 %v634
          %v667 = vunpack.c.l.b16 %v635
          %v668 = vunpack.c.l.b16 %v636
          %v669 = vunpack.c.l.b16 %v637
          %v670 = vunpack.c.l.b16 %v638
          %v671 = vunpack.c.l.b16 %v639
          %v672 = vunpack.c.l.b16 %v640
          %v673 = vunpack.c.l.b16 %v641
          %v674 = vunpack.c.l.b16 %v642
          %v675 = vunpack.c.l.b16 %v643
          %v676 = vpack.c.b16 %v661, %v660
          %v677 = vpack.c.b16 %v663, %v662
          %v678 = vpack.c.b16 %v665, %v664
          %v679 = vpack.c.b16 %v667, %v666
          %v680 = vpack.c.b16 %v669, %v668
          %v681 = vpack.c.b16 %v671, %v670
          %v682 = vpack.c.b16 %v673, %v672
          %v683 = vpack.c.b16 %v675, %v674
          %692 = vmatprep.subr.bf16.mxu0 0
          %693 = vmatpush1.bf16.msra.mxu0 %v676
          %694 = vmatprep.subr.bf16.mxu0 0
          %695 = vmatpush1.bf16.msra.mxu0 %v677
          %696 = vmatprep.subr.bf16.mxu0 0
          %697 = vmatpush1.bf16.msra.mxu0 %v678
          %698 = vmatprep.subr.bf16.mxu0 0
          %699 = vmatpush1.bf16.msra.mxu0 %v679
          %700 = vmatprep.subr.bf16.mxu0 0
          %701 = vmatpush1.bf16.msra.mxu0 %v680
          %702 = vmatprep.subr.bf16.mxu0 0
          %703 = vmatpush1.bf16.msra.mxu0 %v681
          %704 = vmatprep.subr.bf16.mxu0 0
          %705 = vmatpush1.bf16.msra.mxu0 %v682
          %706 = vmatprep.subr.bf16.mxu0 0
          %707 = vmatpush1.bf16.msra.mxu0 %v683
          %708 = vmatprep.subr.bf16.mxu0 0
          %709 = vmatpush1.bf16.msra.mxu0 0
          %710 = vmatprep.subr.bf16.mxu0 0
          %711 = vmatpush1.bf16.msra.mxu0 0
          %712 = vmatprep.subr.bf16.mxu0 0
          %713 = vmatpush1.bf16.msra.mxu0 0
          %714 = vmatprep.subr.bf16.mxu0 0
          %715 = vmatpush1.bf16.msra.mxu0 0
          %716 = vmatprep.subr.bf16.mxu0 0
          %717 = vmatpush1.bf16.msra.mxu0 0
          %718 = vmatprep.subr.bf16.mxu0 0
          %719 = vmatpush1.bf16.msra.mxu0 0
          %720 = vmatprep.subr.bf16.mxu0 0
          %721 = vmatpush1.bf16.msra.mxu0 0
          %722 = vmatprep.subr.bf16.mxu0 0
          %723 = vmatpush1.bf16.msra.mxu0 0
          %724 = vmatprep.mubr.bf16.mxu0 0
          %725 = vmatmul.mubr.bf16.gmra.mrb[0].mxu0 %v620
          %v726 = vpop.f32.mrb[0].mxu0
          %v727 = vadd.f32 0.0, %v726
          %v728 = vpop.f32.mrb[0].mxu0
          %v729 = vpop.f32.mrb[0].mxu0
          %v730 = vadd.f32 0.0, %v729
          %v731 = vpop.f32.mrb[0].mxu0
          %732 = vmatprep.mubr.bf16.mxu0 0
          %733 = vmatmul.mubr.bf16.gmra.mrb[0].mxu0 %v621
          %v734 = vpop.f32.mrb[0].mxu0
          %v735 = vadd.f32 0.0, %v734
          %v736 = vpop.f32.mrb[0].mxu0
          %v737 = vpop.f32.mrb[0].mxu0
          %v738 = vadd.f32 0.0, %v737
          %v739 = vpop.f32.mrb[0].mxu0
          %740 = vmatprep.mubr.bf16.mxu0 0
          %741 = vmatmul.mubr.bf16.gmra.mrb[0].mxu0 %v622
          %v742 = vpop.f32.mrb[0].mxu0
          %v743 = vadd.f32 0.0, %v742
          %v744 = vpop.f32.mrb[0].mxu0
          %v745 = vpop.f32.mrb[0].mxu0
          %v746 = vadd.f32 0.0, %v745
          %v747 = vpop.f32.mrb[0].mxu0
          %748 = vmatprep.mubr.bf16.mxu0 0
          %749 = vmatmul.mubr.bf16.gmra.mrb[0].mxu0 %v623
          %v750 = vpop.f32.mrb[0].mxu0
          %v751 = vadd.f32 0.0, %v750
          %v752 = vpop.f32.mrb[0].mxu0
          %v753 = vpop.f32.mrb[0].mxu0
          %v754 = vadd.f32 0.0, %v753
          %v755 = vpop.f32.mrb[0].mxu0
          %756 = vmatprep.mubr.bf16.mxu0 0
          %757 = vmatmul.mubr.bf16.gmra.mrb[0].mxu0 %v624
          %v758 = vpop.f32.mrb[0].mxu0
          %v759 = vadd.f32 0.0, %v758
          %v760 = vpop.f32.mrb[0].mxu0
          %v761 = vpop.f32.mrb[0].mxu0
          %v762 = vadd.f32 0.0, %v761
          %v763 = vpop.f32.mrb[0].mxu0
          %764 = vmatprep.mubr.bf16.mxu0 0
          %765 = vmatmul.mubr.bf16.gmra.mrb[0].mxu0 %v625
          %v766 = vpop.f32.mrb[0].mxu0
          %v767 = vadd.f32 0.0, %v766
          %v768 = vpop.f32.mrb[0].mxu0
          %v769 = vpop.f32.mrb[0].mxu0
          %v770 = vadd.f32 0.0, %v769
          %v771 = vpop.f32.mrb[0].mxu0
          %772 = vmatprep.mubr.bf16.mxu0 0
          %773 = vmatmul.mubr.bf16.gmra.mrb[0].mxu0 %v626
          %v774 = vpop.f32.mrb[0].mxu0
          %v775 = vadd.f32 0.0, %v774
          %v776 = vpop.f32.mrb[0].mxu0
          %v777 = vpop.f32.mrb[0].mxu0
          %v778 = vadd.f32 0.0, %v777
          %v779 = vpop.f32.mrb[0].mxu0
          %780 = vmatprep.mubr.bf16.mxu0 0
          %781 = vmatmul.mubr.bf16.gmra.mrb[0].mxu0 %v627
          %v782 = vpop.f32.mrb[0].mxu0
          %v783 = vadd.f32 0.0, %v782
          %v784 = vpop.f32.mrb[0].mxu0
          %v785 = vpop.f32.mrb[0].mxu0
          %v786 = vadd.f32 0.0, %v785
          %v787 = vpop.f32.mrb[0].mxu0
          %788 = vdwg.mxu0
          %v789 = vpack.c.bf16 %v730, %v727
          %v790 = vpack.c.bf16 %v738, %v735
          %v791 = vpack.c.bf16 %v746, %v743
          %v792 = vpack.c.bf16 %v754, %v751
          %v793 = vpack.c.bf16 %v762, %v759
          %v794 = vpack.c.bf16 %v770, %v767
          %v795 = vpack.c.bf16 %v778, %v775
          %v796 = vpack.c.bf16 %v786, %v783
          %797 = vst [vmem:[#allocation3] sm:$0xff] %v789
          %798 = vst [vmem:[#allocation3 + $0x8] sm:$0xff] %v790
          %799 = vst [vmem:[#allocation3 + $0x10] sm:$0xff] %v791
          %800 = vst [vmem:[#allocation3 + $0x18] sm:$0xff] %v792
          %801 = vst [vmem:[#allocation3 + $0x20] sm:$0xff] %v793
          %802 = vst [vmem:[#allocation3 + $0x28] sm:$0xff] %v794
          %803 = vst [vmem:[#allocation3 + $0x30] sm:$0xff] %v795
          %804 = vst [vmem:[#allocation3 + $0x38] sm:$0xff] %v796
        $region72: #{tpu_custom_call.1} parent=47 // pred_fallthru
          _
        %v805 = vld [vmem:[#allocation5] sm:$0xf]
        %v806 = vld [vmem:[#allocation5 + $0x4] sm:$0xf]
        %v807 = vld [vmem:[#allocation5 + $0x8] sm:$0xf]
        %v808 = vld [vmem:[#allocation5 + $0xc] sm:$0xf]
        %v809 = vld [vmem:[#allocation5 + $0x10] sm:$0xf]
        %v810 = vld [vmem:[#allocation5 + $0x14] sm:$0xf]
        %v811 = vld [vmem:[#allocation5 + $0x18] sm:$0xf]
        %v812 = vld [vmem:[#allocation5 + $0x1c] sm:$0xf]
        %v813 = vld [vmem:[#allocation5 + $0x20] sm:$0xf]
        %v814 = vld [vmem:[#allocation5 + $0x24] sm:$0xf]
        %v815 = vld [vmem:[#allocation5 + $0x28] sm:$0xf]
        %v816 = vld [vmem:[#allocation5 + $0x2c] sm:$0xf]
        %v817 = vld [vmem:[#allocation5 + $0x30] sm:$0xf]
        %v818 = vld [vmem:[#allocation5 + $0x34] sm:$0xf]
        %v819 = vld [vmem:[#allocation5 + $0x38] sm:$0xf]
        %v820 = vld [vmem:[#allocation5 + $0x3c] sm:$0xf]
        %v821 = vld [vmem:[#allocation3] sm:$0xff]
        %v822 = vld [vmem:[#allocation3 + $0x8] sm:$0xff]
        %v823 = vld [vmem:[#allocation3 + $0x10] sm:$0xff]
        %v824 = vld [vmem:[#allocation3 + $0x18] sm:$0xff]
        %v825 = vld [vmem:[#allocation3 + $0x20] sm:$0xff]
        %v826 = vld [vmem:[#allocation3 + $0x28] sm:$0xff]
        %v827 = vld [vmem:[#allocation3 + $0x30] sm:$0xff]
        %v828 = vld [vmem:[#allocation3 + $0x38] sm:$0xff]
        %v829 = vld [vmem:[%s351] sm:$0x1]
        %v831 = vlaneseq
        %v832 = vshrl.u32 %v831, 7
        %v833 = vsub.s32 0, %v832
        %v834 = vrot.slane %v829, %v833
        %v852 = vunpack.c.l.b16 %v805
        %v853 = vunpack.c.l.b16 %v806
        %v854 = vunpack.c.l.b16 %v807
        %v855 = vunpack.c.l.b16 %v808
        %v856 = vunpack.c.l.b16 %v809
        %v857 = vunpack.c.l.b16 %v810
        %v858 = vunpack.c.l.b16 %v811
        %v859 = vunpack.c.l.b16 %v812
        %v860 = vunpack.c.l.b16 %v813
        %v861 = vunpack.c.l.b16 %v814
        %v862 = vunpack.c.l.b16 %v815
        %v863 = vunpack.c.l.b16 %v816
        %v864 = vunpack.c.l.b16 %v817
        %v865 = vunpack.c.l.b16 %v818
        %v866 = vunpack.c.l.b16 %v819
        %v867 = vunpack.c.l.b16 %v820
        %v868 = vpack.c.b16 %v853, %v852
        %v869 = vpack.c.b16 %v855, %v854
        %v870 = vpack.c.b16 %v857, %v856
        %v871 = vpack.c.b16 %v859, %v858
        %v872 = vpack.c.b16 %v861, %v860
        %v873 = vpack.c.b16 %v863, %v862
        %v874 = vpack.c.b16 %v865, %v864
        %v875 = vpack.c.b16 %v867, %v866
        %884 = vmatprep.subr.bf16.mxu0 0
        %885 = vmatpush1.bf16.msra.mxu0 %v821
        %886 = vmatprep.subr.bf16.mxu0 0
        %887 = vmatpush1.bf16.msra.mxu0 %v822
        %888 = vmatprep.subr.bf16.mxu0 0
        %889 = vmatpush1.bf16.msra.mxu0 %v823
        %890 = vmatprep.subr.bf16.mxu0 0
        %891 = vmatpush1.bf16.msra.mxu0 %v824
        %892 = vmatprep.subr.bf16.mxu0 0
        %893 = vmatpush1.bf16.msra.mxu0 %v825
        %894 = vmatprep.subr.bf16.mxu0 0
        %895 = vmatpush1.bf16.msra.mxu0 %v826
        %896 = vmatprep.subr.bf16.mxu0 0
        %897 = vmatpush1.bf16.msra.mxu0 %v827
        %898 = vmatprep.subr.bf16.mxu0 0
        %899 = vmatpush1.bf16.msra.mxu0 %v828
        %900 = vmatprep.subr.bf16.mxu0 0
        %901 = vmatpush1.bf16.msra.mxu0 0
        %902 = vmatprep.subr.bf16.mxu0 0
        %903 = vmatpush1.bf16.msra.mxu0 0
        %904 = vmatprep.subr.bf16.mxu0 0
        %905 = vmatpush1.bf16.msra.mxu0 0
        %906 = vmatprep.subr.bf16.mxu0 0
        %907 = vmatpush1.bf16.msra.mxu0 0
        %908 = vmatprep.subr.bf16.mxu0 0
        %909 = vmatpush1.bf16.msra.mxu0 0
        %910 = vmatprep.subr.bf16.mxu0 0
        %911 = vmatpush1.bf16.msra.mxu0 0
        %912 = vmatprep.subr.bf16.mxu0 0
        %913 = vmatpush1.bf16.msra.mxu0 0
        %914 = vmatprep.subr.bf16.mxu0 0
        %915 = vmatpush1.bf16.msra.mxu0 0
        %916 = vmatprep.mubr.bf16.mxu0 0
        %917 = vmatmul.mubr.bf16.gmra.mrb[0].mxu0 %v868
        %v918 = vpop.f32.mrb[0].mxu0
        %v919 = vadd.f32 %v834, %v918
        %v920 = vpop.f32.mrb[0].mxu0
        %v921 = vpop.f32.mrb[0].mxu0
        %v922 = vadd.f32 %v834, %v921
        %v923 = vpop.f32.mrb[0].mxu0
        %924 = vmatprep.mubr.bf16.mxu0 0
        %925 = vmatmul.mubr.bf16.gmra.mrb[0].mxu0 %v869
        %v926 = vpop.f32.mrb[0].mxu0
        %v927 = vadd.f32 %v834, %v926
        %v928 = vpop.f32.mrb[0].mxu0
        %v929 = vpop.f32.mrb[0].mxu0
        %v930 = vadd.f32 %v834, %v929
        %v931 = vpop.f32.mrb[0].mxu0
        %932 = vmatprep.mubr.bf16.mxu0 0
        %933 = vmatmul.mubr.bf16.gmra.mrb[0].mxu0 %v870
        %v934 = vpop.f32.mrb[0].mxu0
        %v935 = vadd.f32 %v834, %v934
        %v936 = vpop.f32.mrb[0].mxu0
        %v937 = vpop.f32.mrb[0].mxu0
        %v938 = vadd.f32 %v834, %v937
        %v939 = vpop.f32.mrb[0].mxu0
        %940 = vmatprep.mubr.bf16.mxu0 0
        %941 = vmatmul.mubr.bf16.gmra.mrb[0].mxu0 %v871
        %v942 = vpop.f32.mrb[0].mxu0
        %v943 = vadd.f32 %v834, %v942
        %v944 = vpop.f32.mrb[0].mxu0
        %v945 = vpop.f32.mrb[0].mxu0
        %v946 = vadd.f32 %v834, %v945
        %v947 = vpop.f32.mrb[0].mxu0
        %948 = vmatprep.mubr.bf16.mxu0 0
        %949 = vmatmul.mubr.bf16.gmra.mrb[0].mxu0 %v872
        %v950 = vpop.f32.mrb[0].mxu0
        %v951 = vadd.f32 %v834, %v950
        %v952 = vpop.f32.mrb[0].mxu0
        %v953 = vpop.f32.mrb[0].mxu0
        %v954 = vadd.f32 %v834, %v953
        %v955 = vpop.f32.mrb[0].mxu0
        %956 = vmatprep.mubr.bf16.mxu0 0
        %957 = vmatmul.mubr.bf16.gmra.mrb[0].mxu0 %v873
        %v958 = vpop.f32.mrb[0].mxu0
        %v959 = vadd.f32 %v834, %v958
        %v960 = vpop.f32.mrb[0].mxu0
        %v961 = vpop.f32.mrb[0].mxu0
        %v962 = vadd.f32 %v834, %v961
        %v963 = vpop.f32.mrb[0].mxu0
        %964 = vmatprep.mubr.bf16.mxu0 0
        %965 = vmatmul.mubr.bf16.gmra.mrb[0].mxu0 %v874
        %v966 = vpop.f32.mrb[0].mxu0
        %v967 = vadd.f32 %v834, %v966
        %v968 = vpop.f32.mrb[0].mxu0
        %v969 = vpop.f32.mrb[0].mxu0
        %v970 = vadd.f32 %v834, %v969
        %v971 = vpop.f32.mrb[0].mxu0
        %972 = vmatprep.mubr.bf16.mxu0 0
        %973 = vmatmul.mubr.bf16.gmra.mrb[0].mxu0 %v875
        %v974 = vpop.f32.mrb[0].mxu0
        %v975 = vadd.f32 %v834, %v974
        %v976 = vpop.f32.mrb[0].mxu0
        %v977 = vpop.f32.mrb[0].mxu0
        %v978 = vadd.f32 %v834, %v977
        %v979 = vpop.f32.mrb[0].mxu0
        %980 = vdwg.mxu0
        %p981 = scmp.lt.s32.totalorder %s25, 3
        // Predicated region
        $region73: #{tpu_custom_call.1} parent=47 // pred_check
          %p982 = pneg %p981
        $region74: #{tpu_custom_call.1} parent=47 // pred_check_branch
          %984 = sbr.rel (%p982) target = $region76
        $region75: #{tpu_custom_call.1} parent=47 // pred_region
          %s985 = smul.u32 %s367, 128
          %v986 = vtanh.pop %v919
          %v987 = vtanh.pop %v922
          %v988 = vtanh.pop %v927
          %v989 = vtanh.pop %v930
          %v990 = vtanh.pop %v935
          %v991 = vtanh.pop %v938
          %v992 = vtanh.pop %v943
          %v993 = vtanh.pop %v946
          %v994 = vtanh.pop %v951
          %v995 = vtanh.pop %v954
          %v996 = vtanh.pop %v959
          %v997 = vtanh.pop %v962
          %v998 = vtanh.pop %v967
          %v999 = vtanh.pop %v970
          %v1000 = vtanh.pop %v975
          %v1001 = vtanh.pop %v978
          %v1002 = vpack.c.bf16 %v987, %v986
          %v1003 = vpack.c.bf16 %v989, %v988
          %v1004 = vpack.c.bf16 %v991, %v990
          %v1005 = vpack.c.bf16 %v993, %v992
          %v1006 = vpack.c.bf16 %v995, %v994
          %v1007 = vpack.c.bf16 %v997, %v996
          %v1008 = vpack.c.bf16 %v999, %v998
          %v1009 = vpack.c.bf16 %v1001, %v1000
          %s1010 = sshra.s32 %s985, 4
          %s1011 = sand.u32 %s985, 15
          %s1012 = smul.addr %s1010, 8
          %s1013 = scalar_lea.vmem [#allocation2], %s1012
          %1014 = vst [vmem:[%s1013] sm:$0xff] %v1002
          %1015 = vst [vmem:[%s1013 + $0x8] sm:$0xff] %v1003
          %1016 = vst [vmem:[%s1013 + $0x10] sm:$0xff] %v1004
          %1017 = vst [vmem:[%s1013 + $0x18] sm:$0xff] %v1005
          %1018 = vst [vmem:[%s1013 + $0x20] sm:$0xff] %v1006
          %1019 = vst [vmem:[%s1013 + $0x28] sm:$0xff] %v1007
          %1020 = vst [vmem:[%s1013 + $0x30] sm:$0xff] %v1008
          %1021 = vst [vmem:[%s1013 + $0x38] sm:$0xff] %v1009
        $region76: #{tpu_custom_call.1} parent=47 // pred_fallthru
          _
        %p1022 = scmp.eq.s32.totalorder %s25, 3
        %p1023 = pnand %p1022, %p369
        %p1024 = pneg %p1023
        // Predicated region
        $region77: #{tpu_custom_call.1} parent=47 // pred_check
          _
        $region78: #{tpu_custom_call.1} parent=47 // pred_check_branch
          %1026 = sbr.rel (%p1023) target = $region80
        $region79: #{tpu_custom_call.1} parent=47 // pred_region
          %1027 = vst [vmem:[#allocation4] sm:$0xff] 0.0
        $region80: #{tpu_custom_call.1} parent=47 // pred_fallthru
          _
        // Predicated region
        $region81: #{tpu_custom_call.1} parent=47 // pred_check
          %p1028 = pneg %p1022
        $region82: #{tpu_custom_call.1} parent=47 // pred_check_branch
          %1030 = sbr.rel (%p1028) target = $region84
        $region83: #{tpu_custom_call.1} parent=47 // pred_region
          %v1031 = vld [vmem:[#allocation4] sm:$0xff]
          %v1032 = vld [vmem:[%s4] sm:$0xff]
          %1033 = vmatprep.subr.mxu0 0.0
          %1034 = vmatpush1.msra.mxu0 %v919
          %1035 = vmatprep.subr.mxu0 0.0
          %1036 = vmatpush1.msra.mxu0 %v922
          %1037 = vmatprep.subr.mxu0 0.0
          %1038 = vmatpush1.msra.mxu0 %v927
          %1039 = vmatprep.subr.mxu0 0.0
          %1040 = vmatpush1.msra.mxu0 %v930
          %1041 = vmatprep.subr.mxu0 0.0
          %1042 = vmatpush1.msra.mxu0 %v935
          %1043 = vmatprep.subr.mxu0 0.0
          %1044 = vmatpush1.msra.mxu0 %v938
          %1045 = vmatprep.subr.mxu0 0.0
          %1046 = vmatpush1.msra.mxu0 %v943
          %1047 = vmatprep.subr.mxu0 0.0
          %1048 = vmatpush1.msra.mxu0 %v946
          %1049 = vmatprep.subr.mxu0 0.0
          %1050 = vmatpush1.msra.mxu0 %v951
          %1051 = vmatprep.subr.mxu0 0.0
          %1052 = vmatpush1.msra.mxu0 %v954
          %1053 = vmatprep.subr.mxu0 0.0
          %1054 = vmatpush1.msra.mxu0 %v959
          %1055 = vmatprep.subr.mxu0 0.0
          %1056 = vmatpush1.msra.mxu0 %v962
          %1057 = vmatprep.subr.mxu0 0.0
          %1058 = vmatpush1.msra.mxu0 %v967
          %1059 = vmatprep.subr.mxu0 0.0
          %1060 = vmatpush1.msra.mxu0 %v970
          %1061 = vmatprep.subr.mxu0 0.0
          %1062 = vmatpush1.msra.mxu0 %v975
          %1063 = vmatprep.subr.mxu0 0.0
          %1064 = vmatpush1.msra.mxu0 %v978
          %1065 = vmatprep.subr.mxu0 0.0
          %1066 = vmatpush1.msra.mxu0 0.0
          %1067 = vmatprep.subr.mxu0 0.0
          %1068 = vmatpush1.msra.mxu0 0.0
          %1069 = vmatprep.subr.mxu0 0.0
          %1070 = vmatpush1.msra.mxu0 0.0
          %1071 = vmatprep.subr.mxu0 0.0
          %1072 = vmatpush1.msra.mxu0 0.0
          %1073 = vmatprep.subr.mxu0 0.0
          %1074 = vmatpush1.msra.mxu0 0.0
          %1075 = vmatprep.subr.mxu0 0.0
          %1076 = vmatpush1.msra.mxu0 0.0
          %1077 = vmatprep.subr.mxu0 0.0
          %1078 = vmatpush1.msra.mxu0 0.0
          %1079 = vmatprep.subr.mxu0 0.0
          %1080 = vmatpush1.msra.mxu0 0.0
          %1081 = vmatprep.subr.mxu0 0.0
          %1082 = vmatpush1.msra.mxu0 0.0
          %1083 = vmatprep.subr.mxu0 0.0
          %1084 = vmatpush1.msra.mxu0 0.0
          %1085 = vmatprep.subr.mxu0 0.0
          %1086 = vmatpush1.msra.mxu0 0.0
          %1087 = vmatprep.subr.mxu0 0.0
          %1088 = vmatpush1.msra.mxu0 0.0
          %1089 = vmatprep.subr.mxu0 0.0
          %1090 = vmatpush1.msra.mxu0 0.0
          %1091 = vmatprep.subr.mxu0 0.0
          %1092 = vmatpush1.msra.mxu0 0.0
          %1093 = vmatprep.subr.mxu0 0.0
          %1094 = vmatpush1.msra.mxu0 0.0
          %1095 = vmatprep.subr.mxu0 0.0
          %1096 = vmatpush1.msra.mxu0 0.0
          %1097 = vmatprep.mubr.f32.mxu0 0.0
          %1098 = vmatmul.mubr.f32.gmra.mrb[0].mxu0 %v1032
          %v1099 = vpop.f32.mrb[0].mxu0
          %v1100 = vadd.f32 0.0, %v1099
          %v1101 = vpop.f32.mrb[0].mxu0
          %1102 = vdwg.mxu0
          %v1103 = vadd.f32 %v1031, %v1100
          %1104 = vst [vmem:[#allocation4] sm:$0xff] %v1103
        $region84: #{tpu_custom_call.1} parent=47 // pred_fallthru
          _
        // Predicated region
        $region85: #{tpu_custom_call.1} parent=47 // pred_check
          _
        $region86: #{tpu_custom_call.1} parent=47 // pred_check_branch
          %1106 = sbr.rel (%p1023) target = $region88
        $region87: #{tpu_custom_call.1} parent=47 // pred_region
          %v1107 = vld [vmem:[#allocation4] sm:$0xff]
          %v1108 = vld [vmem:[#allocation11] sm:$0xff]
          %v1109 = vld [vmem:[#allocation11 + $0x8] sm:$0xff]
          %v1110 = vld [vmem:[#allocation11 + $0x10] sm:$0xff]
          %v1111 = vld [vmem:[#allocation11 + $0x18] sm:$0xff]
          %v1112 = vld [vmem:[#allocation11 + $0x20] sm:$0xff]
          %v1113 = vld [vmem:[#allocation11 + $0x28] sm:$0xff]
          %v1114 = vld [vmem:[#allocation11 + $0x30] sm:$0xff]
          %v1115 = vld [vmem:[#allocation11 + $0x38] sm:$0xff]
          %v1116 = vld [vmem:[#allocation11 + $0x40] sm:$0xff]
          %v1117 = vld [vmem:[#allocation11 + $0x48] sm:$0xff]
          %v1118 = vld [vmem:[#allocation11 + $0x50] sm:$0xff]
          %v1119 = vld [vmem:[#allocation11 + $0x58] sm:$0xff]
          %v1120 = vld [vmem:[#allocation11 + $0x60] sm:$0xff]
          %v1121 = vld [vmem:[#allocation11 + $0x68] sm:$0xff]
          %v1122 = vld [vmem:[#allocation11 + $0x70] sm:$0xff]
          %v1123 = vld [vmem:[#allocation11 + $0x78] sm:$0xff]
          %v1124 = vld [vmem:[%s6] sm:$0x1]
          %v1126 = vlaneseq
          %v1127 = vshrl.u32 %v1126, 7
          %v1128 = vsub.s32 0, %v1127
          %v1129 = vrot.slane %v1124, %v1128
          %1131 = vmatprep.subr.mxu0 0.0
          %1132 = vmatpush1.msra.mxu0 %v1108
          %1133 = vmatprep.subr.mxu0 0.0
          %1134 = vmatpush1.msra.mxu0 %v1109
          %1135 = vmatprep.subr.mxu0 0.0
          %1136 = vmatpush1.msra.mxu0 %v1110
          %1137 = vmatprep.subr.mxu0 0.0
          %1138 = vmatpush1.msra.mxu0 %v1111
          %1139 = vmatprep.subr.mxu0 0.0
          %1140 = vmatpush1.msra.mxu0 %v1112
          %1141 = vmatprep.subr.mxu0 0.0
          %1142 = vmatpush1.msra.mxu0 %v1113
          %1143 = vmatprep.subr.mxu0 0.0
          %1144 = vmatpush1.msra.mxu0 %v1114
          %1145 = vmatprep.subr.mxu0 0.0
          %1146 = vmatpush1.msra.mxu0 %v1115
          %1147 = vmatprep.subr.mxu0 0.0
          %1148 = vmatpush1.msra.mxu0 %v1116
          %1149 = vmatprep.subr.mxu0 0.0
          %1150 = vmatpush1.msra.mxu0 %v1117
          %1151 = vmatprep.subr.mxu0 0.0
          %1152 = vmatpush1.msra.mxu0 %v1118
          %1153 = vmatprep.subr.mxu0 0.0
          %1154 = vmatpush1.msra.mxu0 %v1119
          %1155 = vmatprep.subr.mxu0 0.0
          %1156 = vmatpush1.msra.mxu0 %v1120
          %1157 = vmatprep.subr.mxu0 0.0
          %1158 = vmatpush1.msra.mxu0 %v1121
          %1159 = vmatprep.subr.mxu0 0.0
          %1160 = vmatpush1.msra.mxu0 %v1122
          %1161 = vmatprep.subr.mxu0 0.0
          %1162 = vmatpush1.msra.mxu0 %v1123
          %1163 = vmatprep.subr.mxu0 0.0
          %1164 = vmatpush1.msra.mxu0 0.0
          %1165 = vmatprep.subr.mxu0 0.0
          %1166 = vmatpush1.msra.mxu0 0.0
          %1167 = vmatprep.subr.mxu0 0.0
          %1168 = vmatpush1.msra.mxu0 0.0
          %1169 = vmatprep.subr.mxu0 0.0
          %1170 = vmatpush1.msra.mxu0 0.0
          %1171 = vmatprep.subr.mxu0 0.0
          %1172 = vmatpush1.msra.mxu0 0.0
          %1173 = vmatprep.subr.mxu0 0.0
          %1174 = vmatpush1.msra.mxu0 0.0
          %1175 = vmatprep.subr.mxu0 0.0
          %1176 = vmatpush1.msra.mxu0 0.0
          %1177 = vmatprep.subr.mxu0 0.0
          %1178 = vmatpush1.msra.mxu0 0.0
          %1179 = vmatprep.subr.mxu0 0.0
          %1180 = vmatpush1.msra.mxu0 0.0
          %1181 = vmatprep.subr.mxu0 0.0
          %1182 = vmatpush1.msra.mxu0 0.0
          %1183 = vmatprep.subr.mxu0 0.0
          %1184 = vmatpush1.msra.mxu0 0.0
          %1185 = vmatprep.subr.mxu0 0.0
          %1186 = vmatpush1.msra.mxu0 0.0
          %1187 = vmatprep.subr.mxu0 0.0
          %1188 = vmatpush1.msra.mxu0 0.0
          %1189 = vmatprep.subr.mxu0 0.0
          %1190 = vmatpush1.msra.mxu0 0.0
          %1191 = vmatprep.subr.mxu0 0.0
          %1192 = vmatpush1.msra.mxu0 0.0
          %1193 = vmatprep.subr.mxu0 0.0
          %1194 = vmatpush1.msra.mxu0 0.0
          %1195 = vmatprep.mubr.f32.mxu0 0.0
          %1196 = vmatmul.mubr.f32.gmra.mrb[0].mxu0 %v1107
          %v1197 = vpop.f32.mrb[0].mxu0
          %v1198 = vadd.f32 %v1129, %v1197
          %v1199 = vpop.f32.mrb[0].mxu0
          %1200 = vdwg.mxu0
          %1201 = vst [vmem:[#allocation12] sm:$0xff] %v1198
        $region88: #{tpu_custom_call.1} parent=47 // pred_fallthru
          _
        // Predicated region
        $region89: #{tpu_custom_call.1} parent=47 // pred_check
          %p1202 = pneg %p203
        $region90: #{tpu_custom_call.1} parent=47 // pred_check_branch
          %1204 = sbr.rel (%p1202) target = $region92
        $region91: #{tpu_custom_call.1} parent=47 // pred_region
          %s1206 = ssub.s32 128, 128
          %1207 = vsyncadd [#allocation7], %s1206
          %s1209 = sshll.u32 [#allocation12], 4
          %s1210 = int_to_ptr.vmem [resolvable:$true] %s1209
          %1212 = dma.vmem_to_hbm [thread:$0]  %s1210, 128, %s7, [#allocation7]
        $region92: #{tpu_custom_call.1} parent=47 // pred_fallthru
          _
        // Predicated region
        $region93: #{tpu_custom_call.1} parent=47 // pred_check
          %p1213 = pneg %p203
        $region94: #{tpu_custom_call.1} parent=47 // pred_check_branch
          %1215 = sbr.rel (%p1213) target = $region96
        $region95: #{tpu_custom_call.1} parent=47 // pred_region
          %1216 = dma.done [#allocation7], 128
        $region96: #{tpu_custom_call.1} parent=47 // pred_fallthru
          _
      $region48: #{tpu_custom_call.1} parent=5 // pred_fallthru
        _
      %p1217 = scmp.le.s32.totalorder 2, %s16
      // Predicated region
      $region97: #{tpu_custom_call.1} parent=5 // pred_check
        %p1218 = pneg %p1217
      $region98: #{tpu_custom_call.1} parent=5 // pred_check_branch
        %1220 = sbr.rel (%p1218) target = $region100
      $region99: #{tpu_custom_call.1} parent=5 // pred_region
        %s1221 = ssub.s32 %s16, 2
      $region100: #{tpu_custom_call.1} parent=5 // pred_fallthru
        _
    $region6: #{tpu_custom_call.1} parent=1 // loop_footer
      %s20 = sadd.s32 1, %s16
    $region7: #{tpu_custom_call.1} parent=1 // loop_footer_branch
      %15 = sbr.rel target = $region3
    $region8: #{tpu_custom_call.1} parent=1 // loop_exit
      _
    %1222 = vsyncpa [#allocation6], 1
    %s1223 = scalar_lea.sflag [#allocation6], 1
    %1224 = vsyncpa %s1223, 1
    %1225 = vsyncpa [#allocation9], 1
    %1226 = vsyncpa [#allocation7], 1
    %s1227 = scalar_lea.sflag [#allocation7], 1
    %1228 = vsyncpa %s1227, 1

</llo_original>
